<compile_context>
chip_gen: v7x
topology: tpu7x:2x2x1
jax: 0.10.0
libtpu: 0.0.40
codegen_flags: <defaults>
</compile_context>

<pallas_src>
import functools

import numpy as np
import jax
import jax.numpy as jnp
from jax.experimental import pallas as pl
from jax.experimental.pallas import tpu as pltpu

_BN_EPS = 1e-5


def _round_up(x, m):
    return (x + m - 1) // m * m


def _row_tiling(hw):
    """(tile, padded extent) for the H*W (lane) axis."""
    if hw <= 2048:                       # one lane-dense block per image
        return hw, hw
    t = 1024                             # multiple of 128; pipelines the DMA
    return t, _round_up(hw, t)


# --------------------------------------------------------------------------
# Pallas kernels
# --------------------------------------------------------------------------
def _gap_kernel(x_ref, o_ref, *, inv):
    """Per-image, per-channel mean over the H*W axis (accumulator pattern)."""
    @pl.when(pl.program_id(1) == 0)
    def _():
        o_ref[...] = jnp.zeros_like(o_ref)

    o_ref[...] += jnp.sum(x_ref[...].astype(jnp.float32), axis=-1,
                          keepdims=True)

    @pl.when(pl.program_id(1) == pl.num_programs(1) - 1)
    def _():
        o_ref[...] = o_ref[...] * inv


def _att_kernel(g_ref, w1_ref, s1_ref, b1_ref, w2_ref, b2_ref, o_ref, *,
                radix):
    """Fused: radix split-sum -> fc1 -> BN(affine) -> ReLU -> fc2 -> radix softmax.

    g_ref : (radix, Nr, Cg)  pooled means, already split per radix group
    w1    : (Cg, inter)      s1/b1: (1, inter) folded BN (+ fc1 bias)
    w2    : (radix, inter, Cg)   b2: (radix, 1, Cg)
    o_ref : (radix, Nr, Cg)  attention weights (softmax over the radix axis)
    """
    # SAMS split-sum (sum of the radix channel groups of the pooled vector).
    g = g_ref[0]
    for r in range(1, radix):
        g = g + g_ref[r]

    h = jnp.dot(g, w1_ref[...], preferred_element_type=jnp.float32)
    h = jnp.maximum(h * s1_ref[...] + b1_ref[...], 0.0)

    logits = []
    for r in range(radix):
        y = jnp.dot(h, w2_ref[r], preferred_element_type=jnp.float32)
        logits.append(y + b2_ref[r])

    m = logits[0]
    for r in range(1, radix):
        m = jnp.maximum(m, logits[r])
    exps = [jnp.exp(y - m) for y in logits]
    den = exps[0]
    for r in range(1, radix):
        den = den + exps[r]
    inv = 1.0 / den
    for r in range(radix):
        o_ref[r] = exps[r] * inv


def _mul_kernel(x_ref, a_ref, o_ref):
    """out[n, c, hw] = x[n, c, hw] * att[n, c]  (attention broadcast in-kernel)."""
    o_ref[...] = (x_ref[...].astype(jnp.float32) * a_ref[...]).astype(o_ref.dtype)


# --------------------------------------------------------------------------
# Pallas wrappers
# --------------------------------------------------------------------------
def _global_avg_pool(x3, hw_true, thw):
    """(N, C, HWp) -> (N, C) per-channel mean (zero padding along HW is safe)."""
    N, C, HWp = x3.shape
    pooled = pl.pallas_call(
        functools.partial(_gap_kernel, inv=1.0 / float(hw_true)),
        out_shape=jax.ShapeDtypeStruct((N, C, 1), jnp.float32),
        grid=(N, HWp // thw),
        in_specs=[pl.BlockSpec((1, C, thw), lambda n, h: (n, 0, h))],
        out_specs=pl.BlockSpec((1, C, 1), lambda n, h: (n, 0, 0)),
        compiler_params=pltpu.CompilerParams(
            dimension_semantics=("parallel", "arbitrary")),
    )(x3)
    return pooled.reshape(N, C)


def _attention(pooled, params, radix):
    """Fused SAMS attention MLP on the tiny pooled tensor. Returns (N, C)."""
    N, C = pooled.shape
    Cg = C // radix
    Nr = _round_up(N, 8)
    g = jnp.pad(pooled, ((0, Nr - N), (0, 0)))
    g = g.reshape(Nr, radix, Cg).transpose(1, 0, 2)          # (radix, Nr, Cg)

    att = pl.pallas_call(
        functools.partial(_att_kernel, radix=radix),
        out_shape=jax.ShapeDtypeStruct((radix, Nr, Cg), jnp.float32),
    )(g, params["fc1_w"], params["s1"], params["b1"],
      params["fc2_w_r"], params["fc2_b_r"])

    # back to PyTorch channel order: c = r * Cg + cg
    att = att.transpose(1, 0, 2).reshape(Nr, C)
    return att[:N]


def _bcast_mul(x3, att, thw):
    """(N, C, HWp) * (N, C) broadcast over HW, tiled over (N, HW)."""
    N, C, HWp = x3.shape
    a3 = att.reshape(N, C, 1)
    return pl.pallas_call(
        _mul_kernel,
        out_shape=jax.ShapeDtypeStruct((N, C, HWp), x3.dtype),
        grid=(N, HWp // thw),
        in_specs=[pl.BlockSpec((1, C, thw), lambda n, h: (n, 0, h)),
                  pl.BlockSpec((1, C, 1), lambda n, h: (n, 0, 0))],
        out_specs=pl.BlockSpec((1, C, thw), lambda n, h: (n, 0, h)),
        compiler_params=pltpu.CompilerParams(
            dimension_semantics=("parallel", "parallel")),
    )(x3, a3)


@functools.partial(jax.jit, static_argnames=("radix",))
def sams_forward(x, params, *, radix):
    """SAMS forward pass; x is NCHW float32, output NCHW float32."""
    N, C, H, W = x.shape
    HW = H * W
    thw, HWp = _row_tiling(HW)

    x3 = x.reshape(N, C, HW)
    if HWp != HW:
        x3 = jnp.pad(x3, ((0, 0), (0, 0), (0, HWp - HW)))

    pooled = _global_avg_pool(x3, HW, thw)          # (N, C)
    att = _attention(pooled, params, radix)         # (N, C), softmax over radix
    out3 = _bcast_mul(x3, att, thw)                 # (N, C, HWp)
    return out3[:, :, :HW].reshape(N, C, H, W)


# --------------------------------------------------------------------------
# Deterministic parameters (inference-mode BN) + pure-JAX reference
# --------------------------------------------------------------------------
def init_sams_params(in_channels, radix=4, reduction_factor=4, seed=0):
    channels = in_channels // radix
    inter = max(in_channels * radix // reduction_factor, 32)
    ks = jax.random.split(jax.random.PRNGKey(seed), 8)
    raw = {
        "fc1_w": jax.random.normal(ks[0], (channels, inter), jnp.float32)
                 * np.float32(np.sqrt(2.0 / channels)),
        "fc1_b": 0.01 * jax.random.normal(ks[1], (inter,), jnp.float32),
        "gamma": 1.0 + 0.1 * jax.random.normal(ks[2], (inter,), jnp.float32),
        "beta": 0.05 * jax.random.normal(ks[3], (inter,), jnp.float32),
        "mean": 0.02 * jax.random.normal(ks[4], (inter,), jnp.float32),
        "var": jnp.ones((inter,), jnp.float32),
        "fc2_w": jax.random.normal(ks[5], (inter, in_channels), jnp.float32)
                 * np.float32(np.sqrt(2.0 / inter)),
        "fc2_b": 0.01 * jax.random.normal(ks[6], (in_channels,), jnp.float32),
    }
    # Kernel-ready params: BN folded into (scale, bias), fc2 pre-split into
    # per-radix panels — hoisted out of the forward pass (perf review item).
    s1 = raw["gamma"] / jnp.sqrt(raw["var"] + _BN_EPS)
    b1 = (raw["fc1_b"] - raw["mean"]) * s1 + raw["beta"]
    params = {
        "fc1_w": raw["fc1_w"],
        "s1": s1.reshape(1, inter),
        "b1": b1.reshape(1, inter),
        "fc2_w_r": raw["fc2_w"].reshape(inter, radix, channels).transpose(1, 0, 2),
        "fc2_b_r": raw["fc2_b"].reshape(radix, 1, channels),
    }
    return raw, params


def sams_reference(x, raw, radix):
    """Pure-jnp transcription of the PyTorch forward (inference-mode BN)."""
    N, C, H, W = x.shape
    channels = C // radix
    xs = x.reshape(N, radix, channels, H, W)
    gap = xs.sum(axis=1).mean(axis=(2, 3))                       # (N, channels)
    h = gap @ raw["fc1_w"] + raw["fc1_b"]
    h = (h - raw["mean"]) / jnp.sqrt(raw["var"] + _BN_EPS) * raw["gamma"] \
        + raw["beta"]
    h = jnp.maximum(h, 0.0)
    a = h @ raw["fc2_w"] + raw["fc2_b"]                          # (N, C)
    a = jax.nn.softmax(a.reshape(N, radix, channels), axis=1).reshape(N, C)
    return x * a[:, :, None, None]


# --------------------------------------------------------------------------
if __name__ == "__main__":
    radix = 4
    in_channels = 64                         # channels per group = 16, inter = 64
    x = jax.random.normal(jax.random.PRNGKey(0), (2, in_channels, 16, 16),
                          jnp.float32)

    raw, params = init_sams_params(in_channels, radix=radix,
                                   reduction_factor=4, seed=0)

    out = jax.block_until_ready(sams_forward(x, params, radix=radix))

    assert out.shape == x.shape, out.shape
    assert bool(jnp.all(jnp.isfinite(out)))

    ref = sams_reference(x, raw, radix)
    err = float(jnp.max(jnp.abs(out - ref)))
    assert np.isfinite(err) and err < 2e-2, f"max abs error {err}"
    print("KERNEL_OK")
</pallas_src>

<mosaic_0001>
module attributes {stable_mosaic.version = 11 : i64} {
  func.func @_gap_kernel(%arg0: i32, %arg1: i32, %arg2: memref<1x64x256xf32, #tpu.memory_space<vmem>>, %arg3: memref<1x64x1xf32, #tpu.memory_space<vmem>>) attributes {dimension_semantics = [#tpu.dimension_semantics<parallel>, #tpu.dimension_semantics<arbitrary>], iteration_bounds = array<i64: 2, 1>, scalar_prefetch = 0 : i64, scratch_operands = 0 : i64, tpu.core_type = #tpu.core_type<tc>, window_params = [{transform_indices = @transform_0, window_bounds = array<i64: 1, 64, 256>}, {transform_indices = @transform_1, window_bounds = array<i64: 1, 64, 1>}]} {
    %c0_i32 = arith.constant 0 : i32
    %0 = arith.cmpi eq, %arg1, %c0_i32 : i32
    %1 = arith.extui %0 : i1 to i32
    %c0_i32_0 = arith.constant 0 : i32
    %2 = arith.cmpi ne, %1, %c0_i32_0 : i32
    scf.if %2 {
      %cst_11 = arith.constant 0.000000e+00 : f32
      %12 = vector.broadcast %cst_11 : f32 to vector<1x64x1xf32>
      %c0_12 = arith.constant 0 : index
      %c0_13 = arith.constant 0 : index
      %c0_14 = arith.constant 0 : index
      %13 = vector.load %arg3[%c0_12, %c0_13, %c0_14] : memref<1x64x1xf32, #tpu.memory_space<vmem>>, vector<1x64x1xf32>
      tpu.vector_store %arg3[%c0_12, %c0_13, %c0_14], %12 {strides = array<i32>} : memref<1x64x1xf32, #tpu.memory_space<vmem>>, vector<1x64x1xf32>,
    } else {
    }
    %c0 = arith.constant 0 : index
    %c0_1 = arith.constant 0 : index
    %c0_2 = arith.constant 0 : index
    %3 = vector.load %arg3[%c0, %c0_1, %c0_2] : memref<1x64x1xf32, #tpu.memory_space<vmem>>, vector<1x64x1xf32>
    %c0_3 = arith.constant 0 : index
    %c0_4 = arith.constant 0 : index
    %c0_5 = arith.constant 0 : index
    %4 = vector.load %arg2[%c0_3, %c0_4, %c0_5] : memref<1x64x256xf32, #tpu.memory_space<vmem>>, vector<1x64x256xf32>
    %cst = arith.constant dense<0.000000e+00> : vector<1x64xf32>
    %5 = vector.multi_reduction <add>, %4, %cst [2] : vector<1x64x256xf32> to vector<1x64xf32>
    %6 = vector.shape_cast %5 : vector<1x64xf32> to vector<1x64x1xf32>
    %7 = arith.addf %3, %6 : vector<1x64x1xf32>
    %c0_6 = arith.constant 0 : index
    %c0_7 = arith.constant 0 : index
    %c0_8 = arith.constant 0 : index
    %8 = vector.load %arg3[%c0_6, %c0_7, %c0_8] : memref<1x64x1xf32, #tpu.memory_space<vmem>>, vector<1x64x1xf32>
    tpu.vector_store %arg3[%c0_6, %c0_7, %c0_8], %7 {strides = array<i32>} : memref<1x64x1xf32, #tpu.memory_space<vmem>>, vector<1x64x1xf32>,
    %c0_i32_9 = arith.constant 0 : i32
    %9 = arith.cmpi eq, %arg1, %c0_i32_9 : i32
    %10 = arith.extui %9 : i1 to i32
    %c0_i32_10 = arith.constant 0 : i32
    %11 = arith.cmpi ne, %10, %c0_i32_10 : i32
    scf.if %11 {
      %c0_11 = arith.constant 0 : index
      %c0_12 = arith.constant 0 : index
      %c0_13 = arith.constant 0 : index
      %12 = vector.load %arg3[%c0_11, %c0_12, %c0_13] : memref<1x64x1xf32, #tpu.memory_space<vmem>>, vector<1x64x1xf32>
      %cst_14 = arith.constant 3.906250e-03 : f32
      %13 = vector.broadcast %cst_14 : f32 to vector<1x64x1xf32>
      %14 = arith.mulf %12, %13 : vector<1x64x1xf32>
      %c0_15 = arith.constant 0 : index
      %c0_16 = arith.constant 0 : index
      %c0_17 = arith.constant 0 : index
      %15 = vector.load %arg3[%c0_15, %c0_16, %c0_17] : memref<1x64x1xf32, #tpu.memory_space<vmem>>, vector<1x64x1xf32>
      tpu.vector_store %arg3[%c0_15, %c0_16, %c0_17], %14 {strides = array<i32>} : memref<1x64x1xf32, #tpu.memory_space<vmem>>, vector<1x64x1xf32>,
    } else {
    }
    return
  }
  func.func @transform_0(%arg0: i32, %arg1: i32) -> (i32, i32, i32) {
    %c0_i32 = arith.constant 0 : i32
    %c0_i32_0 = arith.constant 0 : i32
    return %arg0, %c0_i32, %arg1 : i32, i32, i32
  }
  func.func @transform_1(%arg0: i32, %arg1: i32) -> (i32, i32, i32) {
    %c0_i32 = arith.constant 0 : i32
    %c0_i32_0 = arith.constant 0 : i32
    %c0_i32_1 = arith.constant 0 : i32
    return %arg0, %c0_i32, %c0_i32_0 : i32, i32, i32
  }
}

module attributes {stable_mosaic.version = 11 : i64} {
  func.func @_mul_kernel(%arg0: i32, %arg1: i32, %arg2: memref<1x64x256xf32, #tpu.memory_space<vmem>>, %arg3: memref<1x64x1xf32, #tpu.memory_space<vmem>>, %arg4: memref<1x64x256xf32, #tpu.memory_space<vmem>>) attributes {dimension_semantics = [#tpu.dimension_semantics<parallel>, #tpu.dimension_semantics<parallel>], iteration_bounds = array<i64: 2, 1>, scalar_prefetch = 0 : i64, scratch_operands = 0 : i64, tpu.core_type = #tpu.core_type<tc>, window_params = [{transform_indices = @transform_0, window_bounds = array<i64: 1, 64, 256>}, {transform_indices = @transform_1, window_bounds = array<i64: 1, 64, 1>}, {transform_indices = @transform_2, window_bounds = array<i64: 1, 64, 256>}]} {
    %c0 = arith.constant 0 : index
    %c0_0 = arith.constant 0 : index
    %c0_1 = arith.constant 0 : index
    %0 = vector.load %arg2[%c0, %c0_0, %c0_1] : memref<1x64x256xf32, #tpu.memory_space<vmem>>, vector<1x64x256xf32>
    %c0_2 = arith.constant 0 : index
    %c0_3 = arith.constant 0 : index
    %c0_4 = arith.constant 0 : index
    %1 = vector.load %arg3[%c0_2, %c0_3, %c0_4] : memref<1x64x1xf32, #tpu.memory_space<vmem>>, vector<1x64x1xf32>
    %2 = vector.broadcast %1 : vector<1x64x1xf32> to vector<1x64x256xf32>
    %3 = arith.mulf %0, %2 : vector<1x64x256xf32>
    %c0_5 = arith.constant 0 : index
    %c0_6 = arith.constant 0 : index
    %c0_7 = arith.constant 0 : index
    %4 = vector.load %arg4[%c0_5, %c0_6, %c0_7] : memref<1x64x256xf32, #tpu.memory_space<vmem>>, vector<1x64x256xf32>
    tpu.vector_store %arg4[%c0_5, %c0_6, %c0_7], %3 {strides = array<i32>} : memref<1x64x256xf32, #tpu.memory_space<vmem>>, vector<1x64x256xf32>,
    return
  }
  func.func @transform_0(%arg0: i32, %arg1: i32) -> (i32, i32, i32) {
    %c0_i32 = arith.constant 0 : i32
    %c0_i32_0 = arith.constant 0 : i32
    return %arg0, %c0_i32, %arg1 : i32, i32, i32
  }
  func.func @transform_1(%arg0: i32, %arg1: i32) -> (i32, i32, i32) {
    %c0_i32 = arith.constant 0 : i32
    %c0_i32_0 = arith.constant 0 : i32
    %c0_i32_1 = arith.constant 0 : i32
    return %arg0, %c0_i32, %c0_i32_0 : i32, i32, i32
  }
  func.func @transform_2(%arg0: i32, %arg1: i32) -> (i32, i32, i32) {
    %c0_i32 = arith.constant 0 : i32
    %c0_i32_0 = arith.constant 0 : i32
    return %arg0, %c0_i32, %arg1 : i32, i32, i32
  }
}

module attributes {stable_mosaic.version = 11 : i64} {
  func.func @_att_kernel(%arg0: memref<4x8x16xf32, #tpu.memory_space<vmem>>, %arg1: memref<16x64xf32, #tpu.memory_space<vmem>>, %arg2: memref<1x64xf32, #tpu.memory_space<vmem>>, %arg3: memref<1x64xf32, #tpu.memory_space<vmem>>, %arg4: memref<4x64x16xf32, #tpu.memory_space<vmem>>, %arg5: memref<4x1x16xf32, #tpu.memory_space<vmem>>, %arg6: memref<4x8x16xf32, #tpu.memory_space<vmem>>) attributes {dimension_semantics = [], scalar_prefetch = 0 : i64, scratch_operands = 0 : i64, tpu.core_type = #tpu.core_type<tc>} {
    %c0 = arith.constant 0 : index
    %c0_0 = arith.constant 0 : index
    %c0_1 = arith.constant 0 : index
    %0 = vector.load %arg0[%c0, %c0_0, %c0_1] : memref<4x8x16xf32, #tpu.memory_space<vmem>>, vector<1x8x16xf32>
    %1 = vector.shape_cast %0 : vector<1x8x16xf32> to vector<8x16xf32>
    %c1 = arith.constant 1 : index
    %c0_2 = arith.constant 0 : index
    %c0_3 = arith.constant 0 : index
    %2 = vector.load %arg0[%c1, %c0_2, %c0_3] : memref<4x8x16xf32, #tpu.memory_space<vmem>>, vector<1x8x16xf32>
    %3 = vector.shape_cast %2 : vector<1x8x16xf32> to vector<8x16xf32>
    %4 = arith.addf %1, %3 : vector<8x16xf32>
    %c2 = arith.constant 2 : index
    %c0_4 = arith.constant 0 : index
    %c0_5 = arith.constant 0 : index
    %5 = vector.load %arg0[%c2, %c0_4, %c0_5] : memref<4x8x16xf32, #tpu.memory_space<vmem>>, vector<1x8x16xf32>
    %6 = vector.shape_cast %5 : vector<1x8x16xf32> to vector<8x16xf32>
    %7 = arith.addf %4, %6 : vector<8x16xf32>
    %c3 = arith.constant 3 : index
    %c0_6 = arith.constant 0 : index
    %c0_7 = arith.constant 0 : index
    %8 = vector.load %arg0[%c3, %c0_6, %c0_7] : memref<4x8x16xf32, #tpu.memory_space<vmem>>, vector<1x8x16xf32>
    %9 = vector.shape_cast %8 : vector<1x8x16xf32> to vector<8x16xf32>
    %10 = arith.addf %7, %9 : vector<8x16xf32>
    %c0_8 = arith.constant 0 : index
    %c0_9 = arith.constant 0 : index
    %11 = vector.load %arg1[%c0_8, %c0_9] : memref<16x64xf32, #tpu.memory_space<vmem>>, vector<16x64xf32>
    %cst = arith.constant dense<0.000000e+00> : vector<8x64xf32>
    %12 = tpu.matmul %10, %11, %cst {dimension_numbers = #tpu.dot_dimension_numbers<[1], [0], [0], [1], [0, 0, 1, 1], [], []>} : vector<8x16xf32>, vector<16x64xf32>, vector<8x64xf32> -> vector<8x64xf32>
    %c0_10 = arith.constant 0 : index
    %c0_11 = arith.constant 0 : index
    %13 = vector.load %arg2[%c0_10, %c0_11] : memref<1x64xf32, #tpu.memory_space<vmem>>, vector<1x64xf32>
    %14 = vector.broadcast %13 : vector<1x64xf32> to vector<8x64xf32>
    %15 = arith.mulf %12, %14 : vector<8x64xf32>
    %c0_12 = arith.constant 0 : index
    %c0_13 = arith.constant 0 : index
    %16 = vector.load %arg3[%c0_12, %c0_13] : memref<1x64xf32, #tpu.memory_space<vmem>>, vector<1x64xf32>
    %17 = vector.broadcast %16 : vector<1x64xf32> to vector<8x64xf32>
    %18 = arith.addf %15, %17 : vector<8x64xf32>
    %cst_14 = arith.constant 0.000000e+00 : f32
    %19 = vector.broadcast %cst_14 : f32 to vector<8x64xf32>
    %20 = arith.maximumf %18, %19 : vector<8x64xf32>
    %c0_15 = arith.constant 0 : index
    %c0_16 = arith.constant 0 : index
    %c0_17 = arith.constant 0 : index
    %21 = vector.load %arg4[%c0_15, %c0_16, %c0_17] : memref<4x64x16xf32, #tpu.memory_space<vmem>>, vector<1x64x16xf32>
    %22 = vector.shape_cast %21 : vector<1x64x16xf32> to vector<64x16xf32>
    %cst_18 = arith.constant dense<0.000000e+00> : vector<8x16xf32>
    %23 = tpu.matmul %20, %22, %cst_18 {dimension_numbers = #tpu.dot_dimension_numbers<[1], [0], [0], [1], [0, 0, 1, 1], [], []>} : vector<8x64xf32>, vector<64x16xf32>, vector<8x16xf32> -> vector<8x16xf32>
    %c0_19 = arith.constant 0 : index
    %c0_20 = arith.constant 0 : index
    %c0_21 = arith.constant 0 : index
    %24 = vector.load %arg5[%c0_19, %c0_20, %c0_21] : memref<4x1x16xf32, #tpu.memory_space<vmem>>, vector<1x1x16xf32>
    %25 = vector.shape_cast %24 : vector<1x1x16xf32> to vector<1x16xf32>
    %26 = vector.broadcast %25 : vector<1x16xf32> to vector<8x16xf32>
    %27 = arith.addf %23, %26 : vector<8x16xf32>
    %c1_22 = arith.constant 1 : index
    %c0_23 = arith.constant 0 : index
    %c0_24 = arith.constant 0 : index
    %28 = vector.load %arg4[%c1_22, %c0_23, %c0_24] : memref<4x64x16xf32, #tpu.memory_space<vmem>>, vector<1x64x16xf32>
    %29 = vector.shape_cast %28 : vector<1x64x16xf32> to vector<64x16xf32>
    %cst_25 = arith.constant dense<0.000000e+00> : vector<8x16xf32>
    %30 = tpu.matmul %20, %29, %cst_25 {dimension_numbers = #tpu.dot_dimension_numbers<[1], [0], [0], [1], [0, 0, 1, 1], [], []>} : vector<8x64xf32>, vector<64x16xf32>, vector<8x16xf32> -> vector<8x16xf32>
    %c1_26 = arith.constant 1 : index
    %c0_27 = arith.constant 0 : index
    %c0_28 = arith.constant 0 : index
    %31 = vector.load %arg5[%c1_26, %c0_27, %c0_28] : memref<4x1x16xf32, #tpu.memory_space<vmem>>, vector<1x1x16xf32>
    %32 = vector.shape_cast %31 : vector<1x1x16xf32> to vector<1x16xf32>
    %33 = vector.broadcast %32 : vector<1x16xf32> to vector<8x16xf32>
    %34 = arith.addf %30, %33 : vector<8x16xf32>
    %c2_29 = arith.constant 2 : index
    %c0_30 = arith.constant 0 : index
    %c0_31 = arith.constant 0 : index
    %35 = vector.load %arg4[%c2_29, %c0_30, %c0_31] : memref<4x64x16xf32, #tpu.memory_space<vmem>>, vector<1x64x16xf32>
    %36 = vector.shape_cast %35 : vector<1x64x16xf32> to vector<64x16xf32>
    %cst_32 = arith.constant dense<0.000000e+00> : vector<8x16xf32>
    %37 = tpu.matmul %20, %36, %cst_32 {dimension_numbers = #tpu.dot_dimension_numbers<[1], [0], [0], [1], [0, 0, 1, 1], [], []>} : vector<8x64xf32>, vector<64x16xf32>, vector<8x16xf32> -> vector<8x16xf32>
    %c2_33 = arith.constant 2 : index
    %c0_34 = arith.constant 0 : index
    %c0_35 = arith.constant 0 : index
    %38 = vector.load %arg5[%c2_33, %c0_34, %c0_35] : memref<4x1x16xf32, #tpu.memory_space<vmem>>, vector<1x1x16xf32>
    %39 = vector.shape_cast %38 : vector<1x1x16xf32> to vector<1x16xf32>
    %40 = vector.broadcast %39 : vector<1x16xf32> to vector<8x16xf32>
    %41 = arith.addf %37, %40 : vector<8x16xf32>
    %c3_36 = arith.constant 3 : index
    %c0_37 = arith.constant 0 : index
    %c0_38 = arith.constant 0 : index
    %42 = vector.load %arg4[%c3_36, %c0_37, %c0_38] : memref<4x64x16xf32, #tpu.memory_space<vmem>>, vector<1x64x16xf32>
    %43 = vector.shape_cast %42 : vector<1x64x16xf32> to vector<64x16xf32>
    %cst_39 = arith.constant dense<0.000000e+00> : vector<8x16xf32>
    %44 = tpu.matmul %20, %43, %cst_39 {dimension_numbers = #tpu.dot_dimension_numbers<[1], [0], [0], [1], [0, 0, 1, 1], [], []>} : vector<8x64xf32>, vector<64x16xf32>, vector<8x16xf32> -> vector<8x16xf32>
    %c3_40 = arith.constant 3 : index
    %c0_41 = arith.constant 0 : index
    %c0_42 = arith.constant 0 : index
    %45 = vector.load %arg5[%c3_40, %c0_41, %c0_42] : memref<4x1x16xf32, #tpu.memory_space<vmem>>, vector<1x1x16xf32>
    %46 = vector.shape_cast %45 : vector<1x1x16xf32> to vector<1x16xf32>
    %47 = vector.broadcast %46 : vector<1x16xf32> to vector<8x16xf32>
    %48 = arith.addf %44, %47 : vector<8x16xf32>
    %49 = arith.maximumf %27, %34 : vector<8x16xf32>
    %50 = arith.maximumf %49, %41 : vector<8x16xf32>
    %51 = arith.maximumf %50, %48 : vector<8x16xf32>
    %52 = arith.subf %27, %51 : vector<8x16xf32>
    %53 = math.exp %52 : vector<8x16xf32>
    %54 = arith.subf %34, %51 : vector<8x16xf32>
    %55 = math.exp %54 : vector<8x16xf32>
    %56 = arith.subf %41, %51 : vector<8x16xf32>
    %57 = math.exp %56 : vector<8x16xf32>
    %58 = arith.subf %48, %51 : vector<8x16xf32>
    %59 = math.exp %58 : vector<8x16xf32>
    %60 = arith.addf %53, %55 : vector<8x16xf32>
    %61 = arith.addf %60, %57 : vector<8x16xf32>
    %62 = arith.addf %61, %59 : vector<8x16xf32>
    %cst_43 = arith.constant 1.000000e+00 : f32
    %63 = vector.broadcast %cst_43 : f32 to vector<8x16xf32>
    %64 = arith.divf %63, %62 : vector<8x16xf32>
    %65 = arith.mulf %53, %64 : vector<8x16xf32>
    %c0_44 = arith.constant 0 : index
    %c0_45 = arith.constant 0 : index
    %c0_46 = arith.constant 0 : index
    %66 = vector.load %arg6[%c0_44, %c0_45, %c0_46] : memref<4x8x16xf32, #tpu.memory_space<vmem>>, vector<1x8x16xf32>
    %67 = vector.shape_cast %66 : vector<1x8x16xf32> to vector<8x16xf32>
    %68 = vector.shape_cast %65 : vector<8x16xf32> to vector<1x8x16xf32>
    tpu.vector_store %arg6[%c0_44, %c0_45, %c0_46], %68 {strides = array<i32>} : memref<4x8x16xf32, #tpu.memory_space<vmem>>, vector<1x8x16xf32>,
    %69 = arith.mulf %55, %64 : vector<8x16xf32>
    %c1_47 = arith.constant 1 : index
    %c0_48 = arith.constant 0 : index
    %c0_49 = arith.constant 0 : index
    %70 = vector.load %arg6[%c1_47, %c0_48, %c0_49] : memref<4x8x16xf32, #tpu.memory_space<vmem>>, vector<1x8x16xf32>
    %71 = vector.shape_cast %70 : vector<1x8x16xf32> to vector<8x16xf32>
    %72 = vector.shape_cast %69 : vector<8x16xf32> to vector<1x8x16xf32>
    tpu.vector_store %arg6[%c1_47, %c0_48, %c0_49], %72 {strides = array<i32>} : memref<4x8x16xf32, #tpu.memory_space<vmem>>, vector<1x8x16xf32>,
    %73 = arith.mulf %57, %64 : vector<8x16xf32>
    %c2_50 = arith.constant 2 : index
    %c0_51 = arith.constant 0 : index
    %c0_52 = arith.constant 0 : index
    %74 = vector.load %arg6[%c2_50, %c0_51, %c0_52] : memref<4x8x16xf32, #tpu.memory_space<vmem>>, vector<1x8x16xf32>
    %75 = vector.shape_cast %74 : vector<1x8x16xf32> to vector<8x16xf32>
    %76 = vector.shape_cast %73 : vector<8x16xf32> to vector<1x8x16xf32>
    tpu.vector_store %arg6[%c2_50, %c0_51, %c0_52], %76 {strides = array<i32>} : memref<4x8x16xf32, #tpu.memory_space<vmem>>, vector<1x8x16xf32>,
    %77 = arith.mulf %59, %64 : vector<8x16xf32>
    %c3_53 = arith.constant 3 : index
    %c0_54 = arith.constant 0 : index
    %c0_55 = arith.constant 0 : index
    %78 = vector.load %arg6[%c3_53, %c0_54, %c0_55] : memref<4x8x16xf32, #tpu.memory_space<vmem>>, vector<1x8x16xf32>
    %79 = vector.shape_cast %78 : vector<1x8x16xf32> to vector<8x16xf32>
    %80 = vector.shape_cast %77 : vector<8x16xf32> to vector<1x8x16xf32>
    tpu.vector_store %arg6[%c3_53, %c0_54, %c0_55], %80 {strides = array<i32>} : memref<4x8x16xf32, #tpu.memory_space<vmem>>, vector<1x8x16xf32>,
    return
  }
}

</mosaic_0001>

<llo_original>
// kernel: sams_forward.3
$region0: #{sams_forward.3}
  #allocation0 [shape = 'u32[]', space=smem, size = 0x4, offset = 0x4, fixed_abs, tag = 'smem constant byte address 0x4 - core index']
  #allocation1 [shape = 'u32[144,128]{1,0:T(1,128)}', space=vmem, size = 0x12000, scoped, tag = 'internal scratch']
  %s0 = inlined_call_operand.vmem [shape: f32[2,64,256], index: 0, kind: input, shape index: {}]
  %s1 = inlined_call_operand.vmem [shape: f32[2,64,1], index: 1, kind: output, shape index: {}]
  %s2 = sld [smem:[#allocation0]]
  $region45: #{sams_forward.3} parent=0
    _
  %s4 = ssub.s32 1, %s2
  %s5 = scalar_select 0, %s4, %s2
  loop: start=0, step=1, limit=4
  $region2: #{sams_forward.3} parent=0 // loop_pre_header
    _
  $region3: #{sams_forward.3} parent=0 // loop_header
    %s7 = sphi 0, %s11
    %p8 = scmp.ge.s32.totalorder %s7, 4
    %s14 = sphi 0, %s26
    %s15 = sphi 0, %s22
    %s16 = sphi 0, %s14
    %s17 = sphi 0, %s15
    %s18 = sphi 0, %s16
    %s19 = sphi 0, %s17
    %s31 = sphi 0, %s33
    %s34 = sphi 0, %s31
    %s35 = sphi 0, %s34
    %s51 = sphi 0, %s35
    %s57 = sphi 0, %s59
    %s60 = sphi 0, %s57
    %s61 = sphi 0, %s60
    %s77 = sphi 0, %s61
  $region4: #{sams_forward.3} parent=0 // loop_header_branch
    %10 = sbr.rel (%p8) target = $region8
  $region5: #{sams_forward.3} parent=0 // loop_body
    %s12 = ssub.s32 %s7, 1
    %s13 = ssub.s32 %s7, 2
    %s20 = sadd.s32 1, %s15
    %p21 = scmp.ge.s32.totalorder %s20, 1
    %s22 = scalar_select %p21, 0, %s20
    %s23 = sadd.s32 1, %s14
    %s24 = scalar_select %p21, %s23, %s14
    %p25 = scmp.ge.s32.totalorder %s24, 2
    %s26 = scalar_select %p25, 0, %s24
    %s27 = ssub.s32 %s14, %s26
    %s28 = ssub.s32 %s15, %s22
    %s29 = sor.u32 %s27, %s28
    %p30 = scmp.eq.s32.totalorder %s29, 0
    %s32 = sadd.s32 %s31, 1
    %s33 = scalar_select %p30, %s31, %s32
    %p36 = pneg %p30
    %p37 = scmp.eq.s32.totalorder %s7, 1
    %p38 = por %p36, %p37
    %p39 = scmp.ne.s32.totalorder %s31, %s34
    %p40 = scmp.eq.s32.totalorder %s7, 0
    %p41 = por %p39, %p40
    %p42 = scmp.ne.s32.totalorder %s31, %s34
    %p43 = scmp.eq.s32.totalorder %s12, 1
    %p44 = por %p42, %p43
    %p45 = scmp.ne.s32.totalorder %s34, %s35
    %p46 = scmp.eq.s32.totalorder %s12, 0
    %p47 = por %p45, %p46
    %p48 = scmp.ne.s32.totalorder %s34, %s35
    %p49 = scmp.eq.s32.totalorder %s13, 1
    %p50 = por %p48, %p49
    %p52 = scmp.ne.s32.totalorder %s35, %s51
    %p53 = scmp.eq.s32.totalorder %s13, 0
    %p54 = por %p52, %p53
    %s55 = ssub.s32 %s14, %s26
    %p56 = scmp.eq.s32.totalorder %s55, 0
    %s58 = sadd.s32 %s57, 1
    %s59 = scalar_select %p56, %s57, %s58
    %p62 = pneg %p56
    %p63 = scmp.eq.s32.totalorder %s7, 1
    %p64 = por %p62, %p63
    %p65 = scmp.ne.s32.totalorder %s57, %s60
    %p66 = scmp.eq.s32.totalorder %s7, 0
    %p67 = por %p65, %p66
    %p68 = scmp.ne.s32.totalorder %s57, %s60
    %p69 = scmp.eq.s32.totalorder %s12, 1
    %p70 = por %p68, %p69
    %p71 = scmp.ne.s32.totalorder %s60, %s61
    %p72 = scmp.eq.s32.totalorder %s12, 0
    %p73 = por %p71, %p72
    %p74 = scmp.ne.s32.totalorder %s60, %s61
    %p75 = scmp.eq.s32.totalorder %s13, 1
    %p76 = por %p74, %p75
    %p78 = scmp.ne.s32.totalorder %s61, %s77
    %p79 = scmp.eq.s32.totalorder %s13, 0
    %p80 = por %p78, %p79
    %p81 = scmp.le.s32.totalorder 1, %s7
    %p82 = scmp.lt.s32.totalorder %s7, 3
    %p83 = pnand %p81, %p82
    %p84 = pneg %p83
    // Predicated region
    $region9: #{sams_forward.3} parent=5 // pred_check
      _
    $region10: #{sams_forward.3} parent=5 // pred_check_branch
      %86 = sbr.rel (%p83) target = $region12
    $region11: #{sams_forward.3} parent=5 // pred_region
      %s87 = ssub.s32 %s7, 1
    $region12: #{sams_forward.3} parent=5 // pred_fallthru
      _
    %p88 = scmp.lt.s32.totalorder %s7, 2
    // Predicated region
    $region13: #{sams_forward.3} parent=5 // pred_check
      %p89 = pneg %p88
    $region14: #{sams_forward.3} parent=5 // pred_check_branch
      %91 = sbr.rel (%p89) target = $region16
    $region15: #{sams_forward.3} parent=5 // pred_region
      // Predicated region
      $region17: #{sams_forward.3} parent=15 // pred_check
        %p92 = pneg %p41
      $region18: #{sams_forward.3} parent=15 // pred_check_branch
        %94 = sbr.rel (%p92) target = $region20
      $region19: #{sams_forward.3} parent=15 // pred_region
        %s95 = smul.u32 2, %s15
        %p96 = scmp.lt.s32.totalorder %s14, 1
        %s97 = scalar_select %p96, %s14, 1
        %p98 = scmp.lt.s32.totalorder %s95, 1
        %s99 = scalar_select %p98, %s95, 1
        %s100 = smul.addr %s97, 16
        %s101 = sadd.s32 %s99, %s100
        %s102 = smul.addr %s101, 8
        %s103 = scalar_lea.vmem %s0, %s102
        %s104 = smul.u32 2, %s15
      $region20: #{sams_forward.3} parent=15 // pred_fallthru
        _
    $region16: #{sams_forward.3} parent=5 // pred_fallthru
      _
    %p105 = scmp.le.s32.totalorder 1, %s7
    %p106 = scmp.lt.s32.totalorder %s7, 3
    %p107 = pnand %p105, %p106
    %p108 = pneg %p107
    // Predicated region
    $region21: #{sams_forward.3} parent=5 // pred_check
      _
    $region22: #{sams_forward.3} parent=5 // pred_check_branch
      %110 = sbr.rel (%p107) target = $region24
    $region23: #{sams_forward.3} parent=5 // pred_region
      %s111 = ssub.s32 %s7, 1
      %s112 = smul.u32 2, %s17
      %p113 = scmp.lt.s32.totalorder %s16, 1
      %s114 = scalar_select %p113, %s16, 1
      %p115 = scmp.lt.s32.totalorder %s112, 1
      %s116 = scalar_select %p115, %s112, 1
      %s117 = smul.addr %s114, 16
      %s118 = sadd.s32 %s116, %s117
      %s119 = smul.addr %s118, 8
      %s120 = scalar_lea.vmem %s0, %s119
      %p121 = pneg %p47
      %p122 = pneg %p44
      %p123 = pneg %p73
      %p124 = pneg %p70
      %p125 = scmp.lt.s32.totalorder %s16, 1
      %s126 = scalar_select %p125, %s16, 1
      %s127 = smul.addr %s126, 8
      %s128 = smul.addr %s127, 8
      %s129 = scalar_lea.vmem %s1, %s128
      %s130 = smul.u32 2, %s17
      %p131 = scmp.lt.s32.totalorder %s16, 1
      %s132 = scalar_select %p131, %s16, 1
      %p133 = scmp.lt.s32.totalorder %s130, 1
      %s134 = scalar_select %p133, %s130, 1
      %s135 = smul.addr %s132, 16
      %s136 = sadd.s32 %s134, %s135
      %s137 = smul.addr %s136, 8
      %s138 = scalar_lea.vmem %s0, %s137
      %s139 = smul.u32 2, %s17
      %p140 = scmp.lt.s32.totalorder %s16, 1
      %s141 = scalar_select %p140, %s16, 1
      %s142 = smul.addr %s141, 8
      %s143 = smul.addr %s142, 8
      %s144 = scalar_lea.vmem %s1, %s143
      %p145 = scmp.eq.s32.totalorder %s17, 0
      // Predicated region
      $region25: #{sams_forward.3} parent=23 // pred_check
        %p146 = pneg %p145
      $region26: #{sams_forward.3} parent=23 // pred_check_branch
        %148 = sbr.rel (%p146) target = $region28
      $region27: #{sams_forward.3} parent=23 // pred_region
        %vm149 = vcmask 7168
        %150 = vst.msk [vmem:[%s144] sm:$0xff] %vm149, 0.0
        %151 = vst.msk [vmem:[%s144 + $0x8] sm:$0xff] %vm149, 0.0
        %152 = vst.msk [vmem:[%s144 + $0x10] sm:$0xff] %vm149, 0.0
        %153 = vst.msk [vmem:[%s144 + $0x18] sm:$0xff] %vm149, 0.0
        %154 = vst.msk [vmem:[%s144 + $0x20] sm:$0xff] %vm149, 0.0
        %155 = vst.msk [vmem:[%s144 + $0x28] sm:$0xff] %vm149, 0.0
        %156 = vst.msk [vmem:[%s144 + $0x30] sm:$0xff] %vm149, 0.0
        %157 = vst.msk [vmem:[%s144 + $0x38] sm:$0xff] %vm149, 0.0
      $region28: #{sams_forward.3} parent=23 // pred_fallthru
        _
      %v158 = vld [vmem:[%s144] sm:$0xff]
      %v159 = vld [vmem:[%s144 + $0x8] sm:$0xff]
      %v160 = vld [vmem:[%s144 + $0x10] sm:$0xff]
      %v161 = vld [vmem:[%s144 + $0x18] sm:$0xff]
      %v162 = vld [vmem:[%s144 + $0x20] sm:$0xff]
      %v163 = vld [vmem:[%s144 + $0x28] sm:$0xff]
      %v164 = vld [vmem:[%s144 + $0x30] sm:$0xff]
      %v165 = vld [vmem:[%s144 + $0x38] sm:$0xff]
      %v166 = vld [vmem:[%s138] sm:$0xff]
      %v167 = vld [vmem:[%s138 + $0x8] sm:$0xff]
      %v168 = vld [vmem:[%s138 + $0x10] sm:$0xff]
      %v169 = vld [vmem:[%s138 + $0x18] sm:$0xff]
      %v170 = vld [vmem:[%s138 + $0x20] sm:$0xff]
      %v171 = vld [vmem:[%s138 + $0x28] sm:$0xff]
      %v172 = vld [vmem:[%s138 + $0x30] sm:$0xff]
      %v173 = vld [vmem:[%s138 + $0x38] sm:$0xff]
      %v174 = vld [vmem:[%s138 + $0x40] sm:$0xff]
      %v175 = vld [vmem:[%s138 + $0x48] sm:$0xff]
      %v176 = vld [vmem:[%s138 + $0x50] sm:$0xff]
      %v177 = vld [vmem:[%s138 + $0x58] sm:$0xff]
      %v178 = vld [vmem:[%s138 + $0x60] sm:$0xff]
      %v179 = vld [vmem:[%s138 + $0x68] sm:$0xff]
      %v180 = vld [vmem:[%s138 + $0x70] sm:$0xff]
      %v181 = vld [vmem:[%s138 + $0x78] sm:$0xff]
      %v182 = vadd.f32 %v166, %v167
      %183 = vadd.xlane.f32.xlu0 %v182
      %v184 = vpop.xlane.xlu0 %183
      %v185 = vadd.f32 %v168, %v169
      %186 = vadd.xlane.f32.xlu0 %v185
      %v187 = vpop.xlane.xlu0 %186
      %v188 = vadd.f32 %v170, %v171
      %189 = vadd.xlane.f32.xlu0 %v188
      %v190 = vpop.xlane.xlu0 %189
      %v191 = vadd.f32 %v172, %v173
      %192 = vadd.xlane.f32.xlu0 %v191
      %v193 = vpop.xlane.xlu0 %192
      %v194 = vadd.f32 %v174, %v175
      %195 = vadd.xlane.f32.xlu0 %v194
      %v196 = vpop.xlane.xlu0 %195
      %v197 = vadd.f32 %v176, %v177
      %198 = vadd.xlane.f32.xlu0 %v197
      %v199 = vpop.xlane.xlu0 %198
      %v200 = vadd.f32 %v178, %v179
      %201 = vadd.xlane.f32.xlu0 %v200
      %v202 = vpop.xlane.xlu0 %201
      %v203 = vadd.f32 %v180, %v181
      %204 = vadd.xlane.f32.xlu0 %v203
      %v205 = vpop.xlane.xlu0 %204
      %v206 = vadd.f32 %v158, %v184
      %v207 = vadd.f32 %v159, %v187
      %v208 = vadd.f32 %v160, %v190
      %v209 = vadd.f32 %v161, %v193
      %v210 = vadd.f32 %v162, %v196
      %v211 = vadd.f32 %v163, %v199
      %v212 = vadd.f32 %v164, %v202
      %v213 = vadd.f32 %v165, %v205
      %vm214 = vcmask 7168
      %215 = vst.msk [vmem:[%s144] sm:$0xff] %vm214, %v206
      %216 = vst.msk [vmem:[%s144 + $0x8] sm:$0xff] %vm214, %v207
      %217 = vst.msk [vmem:[%s144 + $0x10] sm:$0xff] %vm214, %v208
      %218 = vst.msk [vmem:[%s144 + $0x18] sm:$0xff] %vm214, %v209
      %219 = vst.msk [vmem:[%s144 + $0x20] sm:$0xff] %vm214, %v210
      %220 = vst.msk [vmem:[%s144 + $0x28] sm:$0xff] %vm214, %v211
      %221 = vst.msk [vmem:[%s144 + $0x30] sm:$0xff] %vm214, %v212
      %222 = vst.msk [vmem:[%s144 + $0x38] sm:$0xff] %vm214, %v213
      // Predicated region
      $region29: #{sams_forward.3} parent=23 // pred_check
        %p223 = pneg %p145
      $region30: #{sams_forward.3} parent=23 // pred_check_branch
        %225 = sbr.rel (%p223) target = $region32
      $region31: #{sams_forward.3} parent=23 // pred_region
        %v226 = vld [vmem:[%s144] sm:$0xff]
        %v227 = vld [vmem:[%s144 + $0x8] sm:$0xff]
        %v228 = vld [vmem:[%s144 + $0x10] sm:$0xff]
        %v229 = vld [vmem:[%s144 + $0x18] sm:$0xff]
        %v230 = vld [vmem:[%s144 + $0x20] sm:$0xff]
        %v231 = vld [vmem:[%s144 + $0x28] sm:$0xff]
        %v232 = vld [vmem:[%s144 + $0x30] sm:$0xff]
        %v233 = vld [vmem:[%s144 + $0x38] sm:$0xff]
        %v234 = vmul.f32 %v226, 0.00390625
        %v235 = vmul.f32 %v227, 0.00390625
        %v236 = vmul.f32 %v228, 0.00390625
        %v237 = vmul.f32 %v229, 0.00390625
        %v238 = vmul.f32 %v230, 0.00390625
        %v239 = vmul.f32 %v231, 0.00390625
        %v240 = vmul.f32 %v232, 0.00390625
        %v241 = vmul.f32 %v233, 0.00390625
        %242 = vst.msk [vmem:[%s144] sm:$0xff] %vm214, %v234
        %243 = vst.msk [vmem:[%s144 + $0x8] sm:$0xff] %vm214, %v235
        %244 = vst.msk [vmem:[%s144 + $0x10] sm:$0xff] %vm214, %v236
        %245 = vst.msk [vmem:[%s144 + $0x18] sm:$0xff] %vm214, %v237
        %246 = vst.msk [vmem:[%s144 + $0x20] sm:$0xff] %vm214, %v238
        %247 = vst.msk [vmem:[%s144 + $0x28] sm:$0xff] %vm214, %v239
        %248 = vst.msk [vmem:[%s144 + $0x30] sm:$0xff] %vm214, %v240
        %249 = vst.msk [vmem:[%s144 + $0x38] sm:$0xff] %vm214, %v241
      $region32: #{sams_forward.3} parent=23 // pred_fallthru
        _
      %p250 = scmp.lt.s32.totalorder %s16, 1
      %s251 = scalar_select %p250, %s16, 1
      %s252 = smul.addr %s251, 8
      %s253 = smul.addr %s252, 8
      %s254 = scalar_lea.vmem %s1, %s253
      // Predicated region
      $region33: #{sams_forward.3} parent=23 // pred_check
        %p255 = pneg %p70
      $region34: #{sams_forward.3} parent=23 // pred_check_branch
        %257 = sbr.rel (%p255) target = $region36
      $region35: #{sams_forward.3} parent=23 // pred_region
        _
      $region36: #{sams_forward.3} parent=23 // pred_fallthru
        _
    $region24: #{sams_forward.3} parent=5 // pred_fallthru
      _
    %p258 = scmp.le.s32.totalorder 2, %s7
    // Predicated region
    $region37: #{sams_forward.3} parent=5 // pred_check
      %p259 = pneg %p258
    $region38: #{sams_forward.3} parent=5 // pred_check_branch
      %261 = sbr.rel (%p259) target = $region40
    $region39: #{sams_forward.3} parent=5 // pred_region
      %s262 = ssub.s32 %s7, 2
      // Predicated region
      $region41: #{sams_forward.3} parent=39 // pred_check
        %p263 = pneg %p76
      $region42: #{sams_forward.3} parent=39 // pred_check_branch
        %265 = sbr.rel (%p263) target = $region44
      $region43: #{sams_forward.3} parent=39 // pred_region
        %p266 = scmp.lt.s32.totalorder %s18, 1
        %s267 = scalar_select %p266, %s18, 1
        %s268 = smul.addr %s267, 8
        %s269 = smul.addr %s268, 8
        %s270 = scalar_lea.vmem %s1, %s269
      $region44: #{sams_forward.3} parent=39 // pred_fallthru
        _
    $region40: #{sams_forward.3} parent=5 // pred_fallthru
      _
  $region6: #{sams_forward.3} parent=0 // loop_footer
    %s11 = sadd.s32 1, %s7
  $region7: #{sams_forward.3} parent=0 // loop_footer_branch
    %6 = sbr.rel target = $region3
  $region8: #{sams_forward.3} parent=0 // loop_exit
    _

// kernel: sams_forward.5
$region0: #{sams_forward.5}
  #allocation0 [shape = 'u32[]', space=smem, size = 0x4, offset = 0x4, fixed_abs, tag = 'smem constant byte address 0x4 - core index']
  #allocation1 [shape = 'u32[144,128]{1,0:T(1,128)}', space=vmem, size = 0x12000, scoped, tag = 'internal scratch']
  %s0 = inlined_call_operand.vmem [shape: f32[2,64,256], index: 0, kind: input, shape index: {}]
  %s1 = inlined_call_operand.vmem [shape: f32[2,64,1], index: 1, kind: input, shape index: {}]
  %s2 = inlined_call_operand.vmem [shape: f32[2,64,256], index: 2, kind: output, shape index: {}]
  %s3 = sld [smem:[#allocation0]]
  $region41: #{sams_forward.5} parent=0
    _
  %s5 = ssub.s32 1, %s3
  %s6 = scalar_select 0, %s5, %s3
  loop: start=0, step=1, limit=4
  $region2: #{sams_forward.5} parent=0 // loop_pre_header
    _
  $region3: #{sams_forward.5} parent=0 // loop_header
    %s8 = sphi 0, %s12
    %p9 = scmp.ge.s32.totalorder %s8, 4
    %s15 = sphi 0, %s27
    %s16 = sphi 0, %s23
    %s17 = sphi 0, %s15
    %s18 = sphi 0, %s16
    %s19 = sphi 0, %s17
    %s20 = sphi 0, %s18
    %s32 = sphi 0, %s34
    %s35 = sphi 0, %s32
    %s36 = sphi 0, %s35
    %s52 = sphi 0, %s36
    %s58 = sphi 0, %s60
    %s61 = sphi 0, %s58
    %s62 = sphi 0, %s61
    %s78 = sphi 0, %s62
    %s86 = sphi 0, %s88
    %s89 = sphi 0, %s86
    %s90 = sphi 0, %s89
    %s106 = sphi 0, %s90
  $region4: #{sams_forward.5} parent=0 // loop_header_branch
    %11 = sbr.rel (%p9) target = $region8
  $region5: #{sams_forward.5} parent=0 // loop_body
    %s13 = ssub.s32 %s8, 1
    %s14 = ssub.s32 %s8, 2
    %s21 = sadd.s32 1, %s16
    %p22 = scmp.ge.s32.totalorder %s21, 1
    %s23 = scalar_select %p22, 0, %s21
    %s24 = sadd.s32 1, %s15
    %s25 = scalar_select %p22, %s24, %s15
    %p26 = scmp.ge.s32.totalorder %s25, 2
    %s27 = scalar_select %p26, 0, %s25
    %s28 = ssub.s32 %s15, %s27
    %s29 = ssub.s32 %s16, %s23
    %s30 = sor.u32 %s28, %s29
    %p31 = scmp.eq.s32.totalorder %s30, 0
    %s33 = sadd.s32 %s32, 1
    %s34 = scalar_select %p31, %s32, %s33
    %p37 = pneg %p31
    %p38 = scmp.eq.s32.totalorder %s8, 1
    %p39 = por %p37, %p38
    %p40 = scmp.ne.s32.totalorder %s32, %s35
    %p41 = scmp.eq.s32.totalorder %s8, 0
    %p42 = por %p40, %p41
    %p43 = scmp.ne.s32.totalorder %s32, %s35
    %p44 = scmp.eq.s32.totalorder %s13, 1
    %p45 = por %p43, %p44
    %p46 = scmp.ne.s32.totalorder %s35, %s36
    %p47 = scmp.eq.s32.totalorder %s13, 0
    %p48 = por %p46, %p47
    %p49 = scmp.ne.s32.totalorder %s35, %s36
    %p50 = scmp.eq.s32.totalorder %s14, 1
    %p51 = por %p49, %p50
    %p53 = scmp.ne.s32.totalorder %s36, %s52
    %p54 = scmp.eq.s32.totalorder %s14, 0
    %p55 = por %p53, %p54
    %s56 = ssub.s32 %s15, %s27
    %p57 = scmp.eq.s32.totalorder %s56, 0
    %s59 = sadd.s32 %s58, 1
    %s60 = scalar_select %p57, %s58, %s59
    %p63 = pneg %p57
    %p64 = scmp.eq.s32.totalorder %s8, 1
    %p65 = por %p63, %p64
    %p66 = scmp.ne.s32.totalorder %s58, %s61
    %p67 = scmp.eq.s32.totalorder %s8, 0
    %p68 = por %p66, %p67
    %p69 = scmp.ne.s32.totalorder %s58, %s61
    %p70 = scmp.eq.s32.totalorder %s13, 1
    %p71 = por %p69, %p70
    %p72 = scmp.ne.s32.totalorder %s61, %s62
    %p73 = scmp.eq.s32.totalorder %s13, 0
    %p74 = por %p72, %p73
    %p75 = scmp.ne.s32.totalorder %s61, %s62
    %p76 = scmp.eq.s32.totalorder %s14, 1
    %p77 = por %p75, %p76
    %p79 = scmp.ne.s32.totalorder %s62, %s78
    %p80 = scmp.eq.s32.totalorder %s14, 0
    %p81 = por %p79, %p80
    %s82 = ssub.s32 %s15, %s27
    %s83 = ssub.s32 %s16, %s23
    %s84 = sor.u32 %s82, %s83
    %p85 = scmp.eq.s32.totalorder %s84, 0
    %s87 = sadd.s32 %s86, 1
    %s88 = scalar_select %p85, %s86, %s87
    %p91 = pneg %p85
    %p92 = scmp.eq.s32.totalorder %s8, 1
    %p93 = por %p91, %p92
    %p94 = scmp.ne.s32.totalorder %s86, %s89
    %p95 = scmp.eq.s32.totalorder %s8, 0
    %p96 = por %p94, %p95
    %p97 = scmp.ne.s32.totalorder %s86, %s89
    %p98 = scmp.eq.s32.totalorder %s13, 1
    %p99 = por %p97, %p98
    %p100 = scmp.ne.s32.totalorder %s89, %s90
    %p101 = scmp.eq.s32.totalorder %s13, 0
    %p102 = por %p100, %p101
    %p103 = scmp.ne.s32.totalorder %s89, %s90
    %p104 = scmp.eq.s32.totalorder %s14, 1
    %p105 = por %p103, %p104
    %p107 = scmp.ne.s32.totalorder %s90, %s106
    %p108 = scmp.eq.s32.totalorder %s14, 0
    %p109 = por %p107, %p108
    %p110 = scmp.le.s32.totalorder 1, %s8
    %p111 = scmp.lt.s32.totalorder %s8, 3
    %p112 = pnand %p110, %p111
    %p113 = pneg %p112
    // Predicated region
    $region9: #{sams_forward.5} parent=5 // pred_check
      _
    $region10: #{sams_forward.5} parent=5 // pred_check_branch
      %115 = sbr.rel (%p112) target = $region12
    $region11: #{sams_forward.5} parent=5 // pred_region
      %s116 = ssub.s32 %s8, 1
    $region12: #{sams_forward.5} parent=5 // pred_fallthru
      _
    %p117 = scmp.lt.s32.totalorder %s8, 2
    // Predicated region
    $region13: #{sams_forward.5} parent=5 // pred_check
      %p118 = pneg %p117
    $region14: #{sams_forward.5} parent=5 // pred_check_branch
      %120 = sbr.rel (%p118) target = $region16
    $region15: #{sams_forward.5} parent=5 // pred_region
      // Predicated region
      $region17: #{sams_forward.5} parent=15 // pred_check
        %p121 = pneg %p42
      $region18: #{sams_forward.5} parent=15 // pred_check_branch
        %123 = sbr.rel (%p121) target = $region20
      $region19: #{sams_forward.5} parent=15 // pred_region
        %s124 = smul.u32 2, %s16
        %p125 = scmp.lt.s32.totalorder %s15, 1
        %s126 = scalar_select %p125, %s15, 1
        %p127 = scmp.lt.s32.totalorder %s124, 1
        %s128 = scalar_select %p127, %s124, 1
        %s129 = smul.addr %s126, 16
        %s130 = sadd.s32 %s128, %s129
        %s131 = smul.addr %s130, 8
        %s132 = scalar_lea.vmem %s0, %s131
        %s133 = smul.u32 2, %s16
      $region20: #{sams_forward.5} parent=15 // pred_fallthru
        _
      // Predicated region
      $region21: #{sams_forward.5} parent=15 // pred_check
        %p134 = pneg %p68
      $region22: #{sams_forward.5} parent=15 // pred_check_branch
        %136 = sbr.rel (%p134) target = $region24
      $region23: #{sams_forward.5} parent=15 // pred_region
        %p137 = scmp.lt.s32.totalorder %s15, 1
        %s138 = scalar_select %p137, %s15, 1
        %s139 = smul.addr %s138, 8
        %s140 = smul.addr %s139, 8
        %s141 = scalar_lea.vmem %s1, %s140
      $region24: #{sams_forward.5} parent=15 // pred_fallthru
        _
    $region16: #{sams_forward.5} parent=5 // pred_fallthru
      _
    %p142 = scmp.le.s32.totalorder 1, %s8
    %p143 = scmp.lt.s32.totalorder %s8, 3
    %p144 = pnand %p142, %p143
    %p145 = pneg %p144
    // Predicated region
    $region25: #{sams_forward.5} parent=5 // pred_check
      _
    $region26: #{sams_forward.5} parent=5 // pred_check_branch
      %147 = sbr.rel (%p144) target = $region28
    $region27: #{sams_forward.5} parent=5 // pred_region
      %s148 = ssub.s32 %s8, 1
      %s149 = smul.u32 2, %s18
      %p150 = scmp.lt.s32.totalorder %s17, 1
      %s151 = scalar_select %p150, %s17, 1
      %p152 = scmp.lt.s32.totalorder %s149, 1
      %s153 = scalar_select %p152, %s149, 1
      %s154 = smul.addr %s151, 16
      %s155 = sadd.s32 %s153, %s154
      %s156 = smul.addr %s155, 8
      %s157 = scalar_lea.vmem %s0, %s156
      %p158 = pneg %p48
      %p159 = pneg %p45
      %p160 = scmp.lt.s32.totalorder %s17, 1
      %s161 = scalar_select %p160, %s17, 1
      %s162 = smul.addr %s161, 8
      %s163 = smul.addr %s162, 8
      %s164 = scalar_lea.vmem %s1, %s163
      %p165 = pneg %p74
      %p166 = pneg %p71
      %p167 = pneg %p102
      %p168 = pneg %p99
      %s169 = smul.u32 2, %s18
      %p170 = scmp.lt.s32.totalorder %s17, 1
      %s171 = scalar_select %p170, %s17, 1
      %p172 = scmp.lt.s32.totalorder %s169, 1
      %s173 = scalar_select %p172, %s169, 1
      %s174 = smul.addr %s171, 16
      %s175 = sadd.s32 %s173, %s174
      %s176 = smul.addr %s175, 8
      %s177 = scalar_lea.vmem %s2, %s176
      %s178 = smul.u32 2, %s18
      %p179 = scmp.lt.s32.totalorder %s17, 1
      %s180 = scalar_select %p179, %s17, 1
      %p181 = scmp.lt.s32.totalorder %s178, 1
      %s182 = scalar_select %p181, %s178, 1
      %s183 = smul.addr %s180, 16
      %s184 = sadd.s32 %s182, %s183
      %s185 = smul.addr %s184, 8
      %s186 = scalar_lea.vmem %s0, %s185
      %s187 = smul.u32 2, %s18
      %p188 = scmp.lt.s32.totalorder %s17, 1
      %s189 = scalar_select %p188, %s17, 1
      %s190 = smul.addr %s189, 8
      %s191 = smul.addr %s190, 8
      %s192 = scalar_lea.vmem %s1, %s191
      %s193 = smul.u32 2, %s18
      %p194 = scmp.lt.s32.totalorder %s17, 1
      %s195 = scalar_select %p194, %s17, 1
      %p196 = scmp.lt.s32.totalorder %s193, 1
      %s197 = scalar_select %p196, %s193, 1
      %s198 = smul.addr %s195, 16
      %s199 = sadd.s32 %s197, %s198
      %s200 = smul.addr %s199, 8
      %s201 = scalar_lea.vmem %s2, %s200
      %s202 = smul.u32 2, %s18
      %v203 = vld [vmem:[%s186] sm:$0xff]
      %v204 = vld [vmem:[%s186 + $0x8] sm:$0xff]
      %v205 = vld [vmem:[%s186 + $0x10] sm:$0xff]
      %v206 = vld [vmem:[%s186 + $0x18] sm:$0xff]
      %v207 = vld [vmem:[%s186 + $0x20] sm:$0xff]
      %v208 = vld [vmem:[%s186 + $0x28] sm:$0xff]
      %v209 = vld [vmem:[%s186 + $0x30] sm:$0xff]
      %v210 = vld [vmem:[%s186 + $0x38] sm:$0xff]
      %v211 = vld [vmem:[%s186 + $0x40] sm:$0xff]
      %v212 = vld [vmem:[%s186 + $0x48] sm:$0xff]
      %v213 = vld [vmem:[%s186 + $0x50] sm:$0xff]
      %v214 = vld [vmem:[%s186 + $0x58] sm:$0xff]
      %v215 = vld [vmem:[%s186 + $0x60] sm:$0xff]
      %v216 = vld [vmem:[%s186 + $0x68] sm:$0xff]
      %v217 = vld [vmem:[%s186 + $0x70] sm:$0xff]
      %v218 = vld [vmem:[%s186 + $0x78] sm:$0xff]
      %v219 = vld [vmem:[%s192] sm:$0xff]
      %v220 = vld [vmem:[%s192 + $0x8] sm:$0xff]
      %v221 = vld [vmem:[%s192 + $0x10] sm:$0xff]
      %v222 = vld [vmem:[%s192 + $0x18] sm:$0xff]
      %v223 = vld [vmem:[%s192 + $0x20] sm:$0xff]
      %v224 = vld [vmem:[%s192 + $0x28] sm:$0xff]
      %v225 = vld [vmem:[%s192 + $0x30] sm:$0xff]
      %v226 = vld [vmem:[%s192 + $0x38] sm:$0xff]
      %228 = vset.pattern.permute.xlu0 0
      %229 = vperm.xlu0 %228, %v219
      %v230 = vpop.permute.xlu0 %229
      %233 = vset.pattern.permute.xlu0 0
      %234 = vperm.xlu0 %233, %v220
      %v235 = vpop.permute.xlu0 %234
      %238 = vset.pattern.permute.xlu0 0
      %239 = vperm.xlu0 %238, %v221
      %v240 = vpop.permute.xlu0 %239
      %243 = vset.pattern.permute.xlu0 0
      %244 = vperm.xlu0 %243, %v222
      %v245 = vpop.permute.xlu0 %244
      %248 = vset.pattern.permute.xlu0 0
      %249 = vperm.xlu0 %248, %v223
      %v250 = vpop.permute.xlu0 %249
      %253 = vset.pattern.permute.xlu0 0
      %254 = vperm.xlu0 %253, %v224
      %v255 = vpop.permute.xlu0 %254
      %258 = vset.pattern.permute.xlu0 0
      %259 = vperm.xlu0 %258, %v225
      %v260 = vpop.permute.xlu0 %259
      %263 = vset.pattern.permute.xlu0 0
      %264 = vperm.xlu0 %263, %v226
      %v265 = vpop.permute.xlu0 %264
      %v267 = vmul.f32 %v203, %v230
      %v268 = vmul.f32 %v204, %v230
      %v269 = vmul.f32 %v205, %v235
      %v270 = vmul.f32 %v206, %v235
      %v271 = vmul.f32 %v207, %v240
      %v272 = vmul.f32 %v208, %v240
      %v273 = vmul.f32 %v209, %v245
      %v274 = vmul.f32 %v210, %v245
      %v275 = vmul.f32 %v211, %v250
      %v276 = vmul.f32 %v212, %v250
      %v277 = vmul.f32 %v213, %v255
      %v278 = vmul.f32 %v214, %v255
      %v279 = vmul.f32 %v215, %v260
      %v280 = vmul.f32 %v216, %v260
      %v281 = vmul.f32 %v217, %v265
      %v282 = vmul.f32 %v218, %v265
      %283 = vst [vmem:[%s201] sm:$0xff] %v267
      %284 = vst [vmem:[%s201 + $0x8] sm:$0xff] %v268
      %285 = vst [vmem:[%s201 + $0x10] sm:$0xff] %v269
      %286 = vst [vmem:[%s201 + $0x18] sm:$0xff] %v270
      %287 = vst [vmem:[%s201 + $0x20] sm:$0xff] %v271
      %288 = vst [vmem:[%s201 + $0x28] sm:$0xff] %v272
      %289 = vst [vmem:[%s201 + $0x30] sm:$0xff] %v273
      %290 = vst [vmem:[%s201 + $0x38] sm:$0xff] %v274
      %291 = vst [vmem:[%s201 + $0x40] sm:$0xff] %v275
      %292 = vst [vmem:[%s201 + $0x48] sm:$0xff] %v276
      %293 = vst [vmem:[%s201 + $0x50] sm:$0xff] %v277
      %294 = vst [vmem:[%s201 + $0x58] sm:$0xff] %v278
      %295 = vst [vmem:[%s201 + $0x60] sm:$0xff] %v279
      %296 = vst [vmem:[%s201 + $0x68] sm:$0xff] %v280
      %297 = vst [vmem:[%s201 + $0x70] sm:$0xff] %v281
      %298 = vst [vmem:[%s201 + $0x78] sm:$0xff] %v282
      %s299 = smul.u32 2, %s18
      %p300 = scmp.lt.s32.totalorder %s17, 1
      %s301 = scalar_select %p300, %s17, 1
      %p302 = scmp.lt.s32.totalorder %s299, 1
      %s303 = scalar_select %p302, %s299, 1
      %s304 = smul.addr %s301, 16
      %s305 = sadd.s32 %s303, %s304
      %s306 = smul.addr %s305, 8
      %s307 = scalar_lea.vmem %s2, %s306
      // Predicated region
      $region29: #{sams_forward.5} parent=27 // pred_check
        %p308 = pneg %p99
      $region30: #{sams_forward.5} parent=27 // pred_check_branch
        %310 = sbr.rel (%p308) target = $region32
      $region31: #{sams_forward.5} parent=27 // pred_region
        %s311 = smul.u32 2, %s18
      $region32: #{sams_forward.5} parent=27 // pred_fallthru
        _
    $region28: #{sams_forward.5} parent=5 // pred_fallthru
      _
    %p312 = scmp.le.s32.totalorder 2, %s8
    // Predicated region
    $region33: #{sams_forward.5} parent=5 // pred_check
      %p313 = pneg %p312
    $region34: #{sams_forward.5} parent=5 // pred_check_branch
      %315 = sbr.rel (%p313) target = $region36
    $region35: #{sams_forward.5} parent=5 // pred_region
      %s316 = ssub.s32 %s8, 2
      // Predicated region
      $region37: #{sams_forward.5} parent=35 // pred_check
        %p317 = pneg %p105
      $region38: #{sams_forward.5} parent=35 // pred_check_branch
        %319 = sbr.rel (%p317) target = $region40
      $region39: #{sams_forward.5} parent=35 // pred_region
        %s320 = smul.u32 2, %s20
        %p321 = scmp.lt.s32.totalorder %s19, 1
        %s322 = scalar_select %p321, %s19, 1
        %p323 = scmp.lt.s32.totalorder %s320, 1
        %s324 = scalar_select %p323, %s320, 1
        %s325 = smul.addr %s322, 16
        %s326 = sadd.s32 %s324, %s325
        %s327 = smul.addr %s326, 8
        %s328 = scalar_lea.vmem %s2, %s327
      $region40: #{sams_forward.5} parent=35 // pred_fallthru
        _
    $region36: #{sams_forward.5} parent=5 // pred_fallthru
      _
  $region6: #{sams_forward.5} parent=0 // loop_footer
    %s12 = sadd.s32 1, %s8
  $region7: #{sams_forward.5} parent=0 // loop_footer_branch
    %7 = sbr.rel target = $region3
  $region8: #{sams_forward.5} parent=0 // loop_exit
    _

// kernel: sams_forward.4
$region0: #{sams_forward.4}
  #allocation0 [shape = 'u32[]', space=smem, size = 0x4, offset = 0x4, fixed_abs, tag = 'smem constant byte address 0x4 - core index']
  #allocation1 [shape = 'u32[144,128]{1,0:T(1,128)}', space=vmem, size = 0x12000, scoped, tag = 'internal scratch']
  %s0 = inlined_call_operand.vmem [shape: f32[4,8,16], index: 0, kind: input, shape index: {}]
  %s1 = inlined_call_operand.vmem [shape: f32[16,64], index: 1, kind: input, shape index: {}]
  %s2 = inlined_call_operand.vmem [shape: f32[1,64], index: 2, kind: input, shape index: {}]
  %s3 = inlined_call_operand.vmem [shape: f32[1,64], index: 3, kind: input, shape index: {}]
  %s4 = inlined_call_operand.vmem [shape: f32[4,64,16], index: 4, kind: input, shape index: {}]
  %s5 = inlined_call_operand.vmem [shape: f32[4,1,16], index: 5, kind: input, shape index: {}]
  %s6 = inlined_call_operand.vmem [shape: f32[4,8,16], index: 6, kind: output, shape index: {}]
  %s7 = sld [smem:[#allocation0]]
  $region34: #{sams_forward.4} parent=0
    _
  %s9 = ssub.s32 1, %s7
  %s10 = scalar_select 0, %s9, %s7
  // Predicated region
  $region2: #{sams_forward.4} parent=0 // pred_check
    _
  $region3: #{sams_forward.4} parent=0 // pred_check_branch
    %12 = sbr.rel (0) target = $region5
  $region4: #{sams_forward.4} parent=0 // pred_region
    _
  $region5: #{sams_forward.4} parent=0 // pred_fallthru
    _
  // Predicated region
  $region6: #{sams_forward.4} parent=0 // pred_check
    _
  $region7: #{sams_forward.4} parent=0 // pred_check_branch
    %14 = sbr.rel (0) target = $region9
  $region8: #{sams_forward.4} parent=0 // pred_region
    _
  $region9: #{sams_forward.4} parent=0 // pred_fallthru
    _
  // Predicated region
  $region10: #{sams_forward.4} parent=0 // pred_check
    _
  $region11: #{sams_forward.4} parent=0 // pred_check_branch
    %16 = sbr.rel (0) target = $region13
  $region12: #{sams_forward.4} parent=0 // pred_region
    _
  $region13: #{sams_forward.4} parent=0 // pred_fallthru
    _
  // Predicated region
  $region14: #{sams_forward.4} parent=0 // pred_check
    _
  $region15: #{sams_forward.4} parent=0 // pred_check_branch
    %18 = sbr.rel (0) target = $region17
  $region16: #{sams_forward.4} parent=0 // pred_region
    _
  $region17: #{sams_forward.4} parent=0 // pred_fallthru
    _
  // Predicated region
  $region18: #{sams_forward.4} parent=0 // pred_check
    _
  $region19: #{sams_forward.4} parent=0 // pred_check_branch
    %20 = sbr.rel (0) target = $region21
  $region20: #{sams_forward.4} parent=0 // pred_region
    _
  $region21: #{sams_forward.4} parent=0 // pred_fallthru
    _
  // Predicated region
  $region22: #{sams_forward.4} parent=0 // pred_check
    _
  $region23: #{sams_forward.4} parent=0 // pred_check_branch
    %22 = sbr.rel (0) target = $region25
  $region24: #{sams_forward.4} parent=0 // pred_region
    _
  $region25: #{sams_forward.4} parent=0 // pred_fallthru
    _
  %v23 = vld [vmem:[%s0] sm:$0xff]
  %s24 = scalar_lea.vmem %s0, 8
  %v25 = vld [vmem:[%s24] sm:$0xff]
  %v26 = vadd.f32 %v23, %v25
  %s27 = scalar_lea.vmem %s0, 16
  %v28 = vld [vmem:[%s27] sm:$0xff]
  %v29 = vadd.f32 %v26, %v28
  %s30 = scalar_lea.vmem %s0, 24
  %v31 = vld [vmem:[%s30] sm:$0xff]
  %v32 = vadd.f32 %v29, %v31
  %v33 = vld [vmem:[%s1] sm:$0xff]
  %v34 = vld [vmem:[%s1 + $0x8] sm:$0xff]
  %vm35 = vcmask 130048
  %v37 = vsel %vm35, %v32, 0
  %39 = vmatprep.subr.mxu0 0.0
  %40 = vmatpush1.msra.mxu0 %v33
  %41 = vmatprep.subr.mxu0 0.0
  %42 = vmatpush1.msra.mxu0 %v34
  %43 = vmatprep.subr.mxu0 0.0
  %44 = vmatpush1.msra.mxu0 0.0
  %45 = vmatprep.subr.mxu0 0.0
  %46 = vmatpush1.msra.mxu0 0.0
  %47 = vmatprep.subr.mxu0 0.0
  %48 = vmatpush1.msra.mxu0 0.0
  %49 = vmatprep.subr.mxu0 0.0
  %50 = vmatpush1.msra.mxu0 0.0
  %51 = vmatprep.subr.mxu0 0.0
  %52 = vmatpush1.msra.mxu0 0.0
  %53 = vmatprep.subr.mxu0 0.0
  %54 = vmatpush1.msra.mxu0 0.0
  %55 = vmatprep.subr.mxu0 0.0
  %56 = vmatpush1.msra.mxu0 0.0
  %57 = vmatprep.subr.mxu0 0.0
  %58 = vmatpush1.msra.mxu0 0.0
  %59 = vmatprep.subr.mxu0 0.0
  %60 = vmatpush1.msra.mxu0 0.0
  %61 = vmatprep.subr.mxu0 0.0
  %62 = vmatpush1.msra.mxu0 0.0
  %63 = vmatprep.subr.mxu0 0.0
  %64 = vmatpush1.msra.mxu0 0.0
  %65 = vmatprep.subr.mxu0 0.0
  %66 = vmatpush1.msra.mxu0 0.0
  %67 = vmatprep.subr.mxu0 0.0
  %68 = vmatpush1.msra.mxu0 0.0
  %69 = vmatprep.subr.mxu0 0.0
  %70 = vmatpush1.msra.mxu0 0.0
  %71 = vmatprep.subr.mxu0 0.0
  %72 = vmatpush1.msra.mxu0 0.0
  %73 = vmatprep.subr.mxu0 0.0
  %74 = vmatpush1.msra.mxu0 0.0
  %75 = vmatprep.subr.mxu0 0.0
  %76 = vmatpush1.msra.mxu0 0.0
  %77 = vmatprep.subr.mxu0 0.0
  %78 = vmatpush1.msra.mxu0 0.0
  %79 = vmatprep.subr.mxu0 0.0
  %80 = vmatpush1.msra.mxu0 0.0
  %81 = vmatprep.subr.mxu0 0.0
  %82 = vmatpush1.msra.mxu0 0.0
  %83 = vmatprep.subr.mxu0 0.0
  %84 = vmatpush1.msra.mxu0 0.0
  %85 = vmatprep.subr.mxu0 0.0
  %86 = vmatpush1.msra.mxu0 0.0
  %87 = vmatprep.subr.mxu0 0.0
  %88 = vmatpush1.msra.mxu0 0.0
  %89 = vmatprep.subr.mxu0 0.0
  %90 = vmatpush1.msra.mxu0 0.0
  %91 = vmatprep.subr.mxu0 0.0
  %92 = vmatpush1.msra.mxu0 0.0
  %93 = vmatprep.subr.mxu0 0.0
  %94 = vmatpush1.msra.mxu0 0.0
  %95 = vmatprep.subr.mxu0 0.0
  %96 = vmatpush1.msra.mxu0 0.0
  %97 = vmatprep.subr.mxu0 0.0
  %98 = vmatpush1.msra.mxu0 0.0
  %99 = vmatprep.subr.mxu0 0.0
  %100 = vmatpush1.msra.mxu0 0.0
  %101 = vmatprep.subr.mxu0 0.0
  %102 = vmatpush1.msra.mxu0 0.0
  %103 = vmatprep.mubr.f32.mxu0 0.0
  %104 = vmatmul.mubr.f32.gmra.mrb[0].mxu0 %v37
  %v105 = vpop.f32.mrb[0].mxu0
  %v106 = vadd.f32 0.0, %v105
  %v107 = vpop.f32.mrb[0].mxu0
  %108 = vdwg.mxu0
  %v109 = vld [vmem:[%s2] sm:$0x1]
  %v111 = vlaneseq
  %v112 = vshrl.u32 %v111, 7
  %v113 = vsub.s32 0, %v112
  %v114 = vrot.slane %v109, %v113
  %v116 = vmul.f32 %v106, %v114
  %v117 = vld [vmem:[%s3] sm:$0x1]
  %v119 = vlaneseq
  %v120 = vshrl.u32 %v119, 7
  %v121 = vsub.s32 0, %v120
  %v122 = vrot.slane %v117, %v121
  %v124 = vadd.f32 %v116, %v122
  %v125 = vmax.f32 %v124, 0.0
  %v126 = vld [vmem:[%s4] sm:$0xff]
  %v127 = vld [vmem:[%s4 + $0x8] sm:$0xff]
  %v128 = vld [vmem:[%s4 + $0x10] sm:$0xff]
  %v129 = vld [vmem:[%s4 + $0x18] sm:$0xff]
  %v130 = vld [vmem:[%s4 + $0x20] sm:$0xff]
  %v131 = vld [vmem:[%s4 + $0x28] sm:$0xff]
  %v132 = vld [vmem:[%s4 + $0x30] sm:$0xff]
  %v133 = vld [vmem:[%s4 + $0x38] sm:$0xff]
  %v134 = vld [vmem:[%s5] sm:$0x1]
  %v136 = vlaneseq
  %v137 = vshrl.u32 %v136, 7
  %v138 = vsub.s32 0, %v137
  %v139 = vrot.slane %v134, %v138
  %vm141 = vcmask 523264
  %v143 = vsel %vm141, %v125, 0
  %145 = vmatprep.subr.mxu0 0.0
  %146 = vmatpush1.msra.mxu0 %v126
  %147 = vmatprep.subr.mxu0 0.0
  %148 = vmatpush1.msra.mxu0 %v127
  %149 = vmatprep.subr.mxu0 0.0
  %150 = vmatpush1.msra.mxu0 %v128
  %151 = vmatprep.subr.mxu0 0.0
  %152 = vmatpush1.msra.mxu0 %v129
  %153 = vmatprep.subr.mxu0 0.0
  %154 = vmatpush1.msra.mxu0 %v130
  %155 = vmatprep.subr.mxu0 0.0
  %156 = vmatpush1.msra.mxu0 %v131
  %157 = vmatprep.subr.mxu0 0.0
  %158 = vmatpush1.msra.mxu0 %v132
  %159 = vmatprep.subr.mxu0 0.0
  %160 = vmatpush1.msra.mxu0 %v133
  %161 = vmatprep.subr.mxu0 0.0
  %162 = vmatpush1.msra.mxu0 0.0
  %163 = vmatprep.subr.mxu0 0.0
  %164 = vmatpush1.msra.mxu0 0.0
  %165 = vmatprep.subr.mxu0 0.0
  %166 = vmatpush1.msra.mxu0 0.0
  %167 = vmatprep.subr.mxu0 0.0
  %168 = vmatpush1.msra.mxu0 0.0
  %169 = vmatprep.subr.mxu0 0.0
  %170 = vmatpush1.msra.mxu0 0.0
  %171 = vmatprep.subr.mxu0 0.0
  %172 = vmatpush1.msra.mxu0 0.0
  %173 = vmatprep.subr.mxu0 0.0
  %174 = vmatpush1.msra.mxu0 0.0
  %175 = vmatprep.subr.mxu0 0.0
  %176 = vmatpush1.msra.mxu0 0.0
  %177 = vmatprep.subr.mxu0 0.0
  %178 = vmatpush1.msra.mxu0 0.0
  %179 = vmatprep.subr.mxu0 0.0
  %180 = vmatpush1.msra.mxu0 0.0
  %181 = vmatprep.subr.mxu0 0.0
  %182 = vmatpush1.msra.mxu0 0.0
  %183 = vmatprep.subr.mxu0 0.0
  %184 = vmatpush1.msra.mxu0 0.0
  %185 = vmatprep.subr.mxu0 0.0
  %186 = vmatpush1.msra.mxu0 0.0
  %187 = vmatprep.subr.mxu0 0.0
  %188 = vmatpush1.msra.mxu0 0.0
  %189 = vmatprep.subr.mxu0 0.0
  %190 = vmatpush1.msra.mxu0 0.0
  %191 = vmatprep.subr.mxu0 0.0
  %192 = vmatpush1.msra.mxu0 0.0
  %193 = vmatprep.subr.mxu0 0.0
  %194 = vmatpush1.msra.mxu0 0.0
  %195 = vmatprep.subr.mxu0 0.0
  %196 = vmatpush1.msra.mxu0 0.0
  %197 = vmatprep.subr.mxu0 0.0
  %198 = vmatpush1.msra.mxu0 0.0
  %199 = vmatprep.subr.mxu0 0.0
  %200 = vmatpush1.msra.mxu0 0.0
  %201 = vmatprep.subr.mxu0 0.0
  %202 = vmatpush1.msra.mxu0 0.0
  %203 = vmatprep.subr.mxu0 0.0
  %204 = vmatpush1.msra.mxu0 0.0
  %205 = vmatprep.subr.mxu0 0.0
  %206 = vmatpush1.msra.mxu0 0.0
  %207 = vmatprep.subr.mxu0 0.0
  %208 = vmatpush1.msra.mxu0 0.0
  %209 = vmatprep.mubr.f32.mxu0 0.0
  %210 = vmatmul.mubr.f32.gmra.mrb[0].mxu0 %v143
  %v211 = vpop.f32.mrb[0].mxu0
  %v212 = vadd.f32 %v139, %v211
  %v213 = vpop.f32.mrb[0].mxu0
  %214 = vdwg.mxu0
  %s215 = scalar_lea.vmem %s4, 64
  %v216 = vld [vmem:[%s215] sm:$0xff]
  %v217 = vld [vmem:[%s215 + $0x8] sm:$0xff]
  %v218 = vld [vmem:[%s215 + $0x10] sm:$0xff]
  %v219 = vld [vmem:[%s215 + $0x18] sm:$0xff]
  %v220 = vld [vmem:[%s215 + $0x20] sm:$0xff]
  %v221 = vld [vmem:[%s215 + $0x28] sm:$0xff]
  %v222 = vld [vmem:[%s215 + $0x30] sm:$0xff]
  %v223 = vld [vmem:[%s215 + $0x38] sm:$0xff]
  %s224 = scalar_lea.vmem %s5, 1
  %v225 = vld [vmem:[%s224] sm:$0x1]
  %v227 = vlaneseq
  %v228 = vshrl.u32 %v227, 7
  %v229 = vsub.s32 0, %v228
  %v230 = vrot.slane %v225, %v229
  %232 = vmatprep.subr.mxu0 0.0
  %233 = vmatpush1.msra.mxu0 %v216
  %234 = vmatprep.subr.mxu0 0.0
  %235 = vmatpush1.msra.mxu0 %v217
  %236 = vmatprep.subr.mxu0 0.0
  %237 = vmatpush1.msra.mxu0 %v218
  %238 = vmatprep.subr.mxu0 0.0
  %239 = vmatpush1.msra.mxu0 %v219
  %240 = vmatprep.subr.mxu0 0.0
  %241 = vmatpush1.msra.mxu0 %v220
  %242 = vmatprep.subr.mxu0 0.0
  %243 = vmatpush1.msra.mxu0 %v221
  %244 = vmatprep.subr.mxu0 0.0
  %245 = vmatpush1.msra.mxu0 %v222
  %246 = vmatprep.subr.mxu0 0.0
  %247 = vmatpush1.msra.mxu0 %v223
  %248 = vmatprep.subr.mxu0 0.0
  %249 = vmatpush1.msra.mxu0 0.0
  %250 = vmatprep.subr.mxu0 0.0
  %251 = vmatpush1.msra.mxu0 0.0
  %252 = vmatprep.subr.mxu0 0.0
  %253 = vmatpush1.msra.mxu0 0.0
  %254 = vmatprep.subr.mxu0 0.0
  %255 = vmatpush1.msra.mxu0 0.0
  %256 = vmatprep.subr.mxu0 0.0
  %257 = vmatpush1.msra.mxu0 0.0
  %258 = vmatprep.subr.mxu0 0.0
  %259 = vmatpush1.msra.mxu0 0.0
  %260 = vmatprep.subr.mxu0 0.0
  %261 = vmatpush1.msra.mxu0 0.0
  %262 = vmatprep.subr.mxu0 0.0
  %263 = vmatpush1.msra.mxu0 0.0
  %264 = vmatprep.subr.mxu0 0.0
  %265 = vmatpush1.msra.mxu0 0.0
  %266 = vmatprep.subr.mxu0 0.0
  %267 = vmatpush1.msra.mxu0 0.0
  %268 = vmatprep.subr.mxu0 0.0
  %269 = vmatpush1.msra.mxu0 0.0
  %270 = vmatprep.subr.mxu0 0.0
  %271 = vmatpush1.msra.mxu0 0.0
  %272 = vmatprep.subr.mxu0 0.0
  %273 = vmatpush1.msra.mxu0 0.0
  %274 = vmatprep.subr.mxu0 0.0
  %275 = vmatpush1.msra.mxu0 0.0
  %276 = vmatprep.subr.mxu0 0.0
  %277 = vmatpush1.msra.mxu0 0.0
  %278 = vmatprep.subr.mxu0 0.0
  %279 = vmatpush1.msra.mxu0 0.0
  %280 = vmatprep.subr.mxu0 0.0
  %281 = vmatpush1.msra.mxu0 0.0
  %282 = vmatprep.subr.mxu0 0.0
  %283 = vmatpush1.msra.mxu0 0.0
  %284 = vmatprep.subr.mxu0 0.0
  %285 = vmatpush1.msra.mxu0 0.0
  %286 = vmatprep.subr.mxu0 0.0
  %287 = vmatpush1.msra.mxu0 0.0
  %288 = vmatprep.subr.mxu0 0.0
  %289 = vmatpush1.msra.mxu0 0.0
  %290 = vmatprep.subr.mxu0 0.0
  %291 = vmatpush1.msra.mxu0 0.0
  %292 = vmatprep.subr.mxu0 0.0
  %293 = vmatpush1.msra.mxu0 0.0
  %294 = vmatprep.subr.mxu0 0.0
  %295 = vmatpush1.msra.mxu0 0.0
  %296 = vmatprep.mubr.f32.mxu0 0.0
  %297 = vmatmul.mubr.f32.gmra.mrb[0].mxu0 %v143
  %v298 = vpop.f32.mrb[0].mxu0
  %v299 = vadd.f32 %v230, %v298
  %v300 = vpop.f32.mrb[0].mxu0
  %301 = vdwg.mxu0
  %s302 = scalar_lea.vmem %s4, 128
  %v303 = vld [vmem:[%s302] sm:$0xff]
  %v304 = vld [vmem:[%s302 + $0x8] sm:$0xff]
  %v305 = vld [vmem:[%s302 + $0x10] sm:$0xff]
  %v306 = vld [vmem:[%s302 + $0x18] sm:$0xff]
  %v307 = vld [vmem:[%s302 + $0x20] sm:$0xff]
  %v308 = vld [vmem:[%s302 + $0x28] sm:$0xff]
  %v309 = vld [vmem:[%s302 + $0x30] sm:$0xff]
  %v310 = vld [vmem:[%s302 + $0x38] sm:$0xff]
  %s311 = scalar_lea.vmem %s5, 2
  %v312 = vld [vmem:[%s311] sm:$0x1]
  %v314 = vlaneseq
  %v315 = vshrl.u32 %v314, 7
  %v316 = vsub.s32 0, %v315
  %v317 = vrot.slane %v312, %v316
  %319 = vmatprep.subr.mxu0 0.0
  %320 = vmatpush1.msra.mxu0 %v303
  %321 = vmatprep.subr.mxu0 0.0
  %322 = vmatpush1.msra.mxu0 %v304
  %323 = vmatprep.subr.mxu0 0.0
  %324 = vmatpush1.msra.mxu0 %v305
  %325 = vmatprep.subr.mxu0 0.0
  %326 = vmatpush1.msra.mxu0 %v306
  %327 = vmatprep.subr.mxu0 0.0
  %328 = vmatpush1.msra.mxu0 %v307
  %329 = vmatprep.subr.mxu0 0.0
  %330 = vmatpush1.msra.mxu0 %v308
  %331 = vmatprep.subr.mxu0 0.0
  %332 = vmatpush1.msra.mxu0 %v309
  %333 = vmatprep.subr.mxu0 0.0
  %334 = vmatpush1.msra.mxu0 %v310
  %335 = vmatprep.subr.mxu0 0.0
  %336 = vmatpush1.msra.mxu0 0.0
  %337 = vmatprep.subr.mxu0 0.0
  %338 = vmatpush1.msra.mxu0 0.0
  %339 = vmatprep.subr.mxu0 0.0
  %340 = vmatpush1.msra.mxu0 0.0
  %341 = vmatprep.subr.mxu0 0.0
  %342 = vmatpush1.msra.mxu0 0.0
  %343 = vmatprep.subr.mxu0 0.0
  %344 = vmatpush1.msra.mxu0 0.0
  %345 = vmatprep.subr.mxu0 0.0
  %346 = vmatpush1.msra.mxu0 0.0
  %347 = vmatprep.subr.mxu0 0.0
  %348 = vmatpush1.msra.mxu0 0.0
  %349 = vmatprep.subr.mxu0 0.0
  %350 = vmatpush1.msra.mxu0 0.0
  %351 = vmatprep.subr.mxu0 0.0
  %352 = vmatpush1.msra.mxu0 0.0
  %353 = vmatprep.subr.mxu0 0.0
  %354 = vmatpush1.msra.mxu0 0.0
  %355 = vmatprep.subr.mxu0 0.0
  %356 = vmatpush1.msra.mxu0 0.0
  %357 = vmatprep.subr.mxu0 0.0
  %358 = vmatpush1.msra.mxu0 0.0
  %359 = vmatprep.subr.mxu0 0.0
  %360 = vmatpush1.msra.mxu0 0.0
  %361 = vmatprep.subr.mxu0 0.0
  %362 = vmatpush1.msra.mxu0 0.0
  %363 = vmatprep.subr.mxu0 0.0
  %364 = vmatpush1.msra.mxu0 0.0
  %365 = vmatprep.subr.mxu0 0.0
  %366 = vmatpush1.msra.mxu0 0.0
  %367 = vmatprep.subr.mxu0 0.0
  %368 = vmatpush1.msra.mxu0 0.0
  %369 = vmatprep.subr.mxu0 0.0
  %370 = vmatpush1.msra.mxu0 0.0
  %371 = vmatprep.subr.mxu0 0.0
  %372 = vmatpush1.msra.mxu0 0.0
  %373 = vmatprep.subr.mxu0 0.0
  %374 = vmatpush1.msra.mxu0 0.0
  %375 = vmatprep.subr.mxu0 0.0
  %376 = vmatpush1.msra.mxu0 0.0
  %377 = vmatprep.subr.mxu0 0.0
  %378 = vmatpush1.msra.mxu0 0.0
  %379 = vmatprep.subr.mxu0 0.0
  %380 = vmatpush1.msra.mxu0 0.0
  %381 = vmatprep.subr.mxu0 0.0
  %382 = vmatpush1.msra.mxu0 0.0
  %383 = vmatprep.mubr.f32.mxu0 0.0
  %384 = vmatmul.mubr.f32.gmra.mrb[0].mxu0 %v143
  %v385 = vpop.f32.mrb[0].mxu0
  %v386 = vadd.f32 %v317, %v385
  %v387 = vpop.f32.mrb[0].mxu0
  %388 = vdwg.mxu0
  %s389 = scalar_lea.vmem %s4, 192
  %v390 = vld [vmem:[%s389] sm:$0xff]
  %v391 = vld [vmem:[%s389 + $0x8] sm:$0xff]
  %v392 = vld [vmem:[%s389 + $0x10] sm:$0xff]
  %v393 = vld [vmem:[%s389 + $0x18] sm:$0xff]
  %v394 = vld [vmem:[%s389 + $0x20] sm:$0xff]
  %v395 = vld [vmem:[%s389 + $0x28] sm:$0xff]
  %v396 = vld [vmem:[%s389 + $0x30] sm:$0xff]
  %v397 = vld [vmem:[%s389 + $0x38] sm:$0xff]
  %s398 = scalar_lea.vmem %s5, 3
  %v399 = vld [vmem:[%s398] sm:$0x1]
  %v401 = vlaneseq
  %v402 = vshrl.u32 %v401, 7
  %v403 = vsub.s32 0, %v402
  %v404 = vrot.slane %v399, %v403
  %406 = vmatprep.subr.mxu0 0.0
  %407 = vmatpush1.msra.mxu0 %v390
  %408 = vmatprep.subr.mxu0 0.0
  %409 = vmatpush1.msra.mxu0 %v391
  %410 = vmatprep.subr.mxu0 0.0
  %411 = vmatpush1.msra.mxu0 %v392
  %412 = vmatprep.subr.mxu0 0.0
  %413 = vmatpush1.msra.mxu0 %v393
  %414 = vmatprep.subr.mxu0 0.0
  %415 = vmatpush1.msra.mxu0 %v394
  %416 = vmatprep.subr.mxu0 0.0
  %417 = vmatpush1.msra.mxu0 %v395
  %418 = vmatprep.subr.mxu0 0.0
  %419 = vmatpush1.msra.mxu0 %v396
  %420 = vmatprep.subr.mxu0 0.0
  %421 = vmatpush1.msra.mxu0 %v397
  %422 = vmatprep.subr.mxu0 0.0
  %423 = vmatpush1.msra.mxu0 0.0
  %424 = vmatprep.subr.mxu0 0.0
  %425 = vmatpush1.msra.mxu0 0.0
  %426 = vmatprep.subr.mxu0 0.0
  %427 = vmatpush1.msra.mxu0 0.0
  %428 = vmatprep.subr.mxu0 0.0
  %429 = vmatpush1.msra.mxu0 0.0
  %430 = vmatprep.subr.mxu0 0.0
  %431 = vmatpush1.msra.mxu0 0.0
  %432 = vmatprep.subr.mxu0 0.0
  %433 = vmatpush1.msra.mxu0 0.0
  %434 = vmatprep.subr.mxu0 0.0
  %435 = vmatpush1.msra.mxu0 0.0
  %436 = vmatprep.subr.mxu0 0.0
  %437 = vmatpush1.msra.mxu0 0.0
  %438 = vmatprep.subr.mxu0 0.0
  %439 = vmatpush1.msra.mxu0 0.0
  %440 = vmatprep.subr.mxu0 0.0
  %441 = vmatpush1.msra.mxu0 0.0
  %442 = vmatprep.subr.mxu0 0.0
  %443 = vmatpush1.msra.mxu0 0.0
  %444 = vmatprep.subr.mxu0 0.0
  %445 = vmatpush1.msra.mxu0 0.0
  %446 = vmatprep.subr.mxu0 0.0
  %447 = vmatpush1.msra.mxu0 0.0
  %448 = vmatprep.subr.mxu0 0.0
  %449 = vmatpush1.msra.mxu0 0.0
  %450 = vmatprep.subr.mxu0 0.0
  %451 = vmatpush1.msra.mxu0 0.0
  %452 = vmatprep.subr.mxu0 0.0
  %453 = vmatpush1.msra.mxu0 0.0
  %454 = vmatprep.subr.mxu0 0.0
  %455 = vmatpush1.msra.mxu0 0.0
  %456 = vmatprep.subr.mxu0 0.0
  %457 = vmatpush1.msra.mxu0 0.0
  %458 = vmatprep.subr.mxu0 0.0
  %459 = vmatpush1.msra.mxu0 0.0
  %460 = vmatprep.subr.mxu0 0.0
  %461 = vmatpush1.msra.mxu0 0.0
  %462 = vmatprep.subr.mxu0 0.0
  %463 = vmatpush1.msra.mxu0 0.0
  %464 = vmatprep.subr.mxu0 0.0
  %465 = vmatpush1.msra.mxu0 0.0
  %466 = vmatprep.subr.mxu0 0.0
  %467 = vmatpush1.msra.mxu0 0.0
  %468 = vmatprep.subr.mxu0 0.0
  %469 = vmatpush1.msra.mxu0 0.0
  %470 = vmatprep.mubr.f32.mxu0 0.0
  %471 = vmatmul.mubr.f32.gmra.mrb[0].mxu0 %v143
  %v472 = vpop.f32.mrb[0].mxu0
  %v473 = vadd.f32 %v404, %v472
  %v474 = vpop.f32.mrb[0].mxu0
  %475 = vdwg.mxu0
  %v476 = vmax.f32 %v212, %v299
  %v477 = vmax.f32 %v476, %v386
  %v478 = vmax.f32 %v477, %v473
  %v479 = vsub.f32 %v212, %v478
  %v480 = vmul.f32 %v479, 1.442695
  %v481 = vpow.pop %v480
  %v482 = vsub.f32 %v299, %v478
  %v483 = vmul.f32 %v482, 1.442695
  %v484 = vpow.pop %v483
  %v485 = vsub.f32 %v386, %v478
  %v486 = vmul.f32 %v485, 1.442695
  %v487 = vpow.pop %v486
  %v488 = vsub.f32 %v473, %v478
  %v489 = vmul.f32 %v488, 1.442695
  %v490 = vpow.pop %v489
  %v491 = vadd.f32 %v481, %v484
  %v492 = vadd.f32 %v491, %v487
  %v493 = vadd.f32 %v492, %v490
  %v494 = vrcp.pop %v493
  %v495 = vmul.f32 1.0, %v494
  %v496 = vmul.f32 %v481, %v495
  %497 = vst.msk [vmem:[%s6] sm:$0xff] %vm35, %v496
  %v498 = vmul.f32 %v484, %v495
  %s499 = scalar_lea.vmem %s6, 8
  %500 = vst.msk [vmem:[%s499] sm:$0xff] %vm35, %v498
  %v501 = vmul.f32 %v487, %v495
  %s502 = scalar_lea.vmem %s6, 16
  %503 = vst.msk [vmem:[%s502] sm:$0xff] %vm35, %v501
  %v504 = vmul.f32 %v490, %v495
  %s505 = scalar_lea.vmem %s6, 24
  %506 = vst.msk [vmem:[%s505] sm:$0xff] %vm35, %v504
  // Predicated region
  $region26: #{sams_forward.4} parent=0 // pred_check
    _
  $region27: #{sams_forward.4} parent=0 // pred_check_branch
    %508 = sbr.rel (0) target = $region29
  $region28: #{sams_forward.4} parent=0 // pred_region
    _
  $region29: #{sams_forward.4} parent=0 // pred_fallthru
    _
  // Predicated region
  $region30: #{sams_forward.4} parent=0 // pred_check
    _
  $region31: #{sams_forward.4} parent=0 // pred_check_branch
    %510 = sbr.rel (0) target = $region33
  $region32: #{sams_forward.4} parent=0 // pred_region
    _
  $region33: #{sams_forward.4} parent=0 // pred_fallthru
    _

</llo_original>
